<compile_context>
chip_gen: v6e
topology: v6e:2x2x1
jax: 0.10.0
libtpu: 0.0.40
codegen_flags: <defaults>
</compile_context>

<pallas_src>
import math
from functools import partial

import jax
import jax.numpy as jnp
from jax.experimental import pallas as pl
from jax.experimental.pallas import tpu as pltpu


# --------------------------------------------------------------------------
# Kernel: one grid step = `tm` batch rows, presented packed as
#   x_packed : (tm//pack, pack*in)   bf16
#   w1_big   : (pack*in, pack*hidden) bf16   block-diagonal copies of w1
#   b1_big   : (1, pack*hidden)       f32    tiled b1
#   w2_big   : (pack*hidden, 128)     bf16   block-diagonal copies of (padded) w2
#   b2_big   : (1, 128)               f32    tiled (padded) b2
#   out      : (tm//pack, 128)        f32    pack rows' outputs per 128-lane row
# --------------------------------------------------------------------------
def mlp_packed_kernel(x_ref, w1_ref, b1_ref, w2_ref, b2_ref, o_ref):
    # fc1 (block-diagonal packed): bf16 operands on the MXU, f32 accumulate.
    h = jnp.dot(x_ref[...], w1_ref[...], preferred_element_type=jnp.float32)
    # bias + ReLU in f32 on the VPU (v5e has no bf16 VALU; accumulator is f32).
    h = jnp.maximum(h + b1_ref[...], 0.0)
    # fc2 (block-diagonal packed) -> dense, lane-packed 128-wide output.
    y = jnp.dot(h.astype(jnp.bfloat16), w2_ref[...],
                preferred_element_type=jnp.float32)
    o_ref[...] = y + b2_ref[...]


def _packing(out_size):
    """Pad out_size to a divisor of 128 and return (out_padded, pack)."""
    if out_size >= 128:
        return pl.cdiv(out_size, 128) * 128, 1
    out_p = 1 << (out_size - 1).bit_length()          # next power of two
    return out_p, 128 // out_p


def prepare_params(w1, b1, w2, b2):
    """One-time weight prep (hoisted off the per-forward path).

    w1: (in, hidden), b1: (1, hidden), w2: (hidden, out), b2: (1, out)
    Builds block-diagonal bf16 weights so `pack` batch rows share one
    128-lane output row.
    """
    in_size, hidden = w1.shape
    out_size = w2.shape[1]
    out_p, pack = _packing(out_size)

    # Pad fc2 to out_p columns (zeros -> sliced off after the call).
    w2p = jnp.zeros((hidden, out_p), jnp.float32).at[:, :out_size].set(w2)
    b2p = jnp.zeros((1, out_p), jnp.float32).at[:, :out_size].set(b2)

    eye = jnp.eye(pack, dtype=jnp.float32)
    w1_big = jnp.kron(eye, w1.astype(jnp.float32)).astype(jnp.bfloat16)
    w2_big = jnp.kron(eye, w2p).astype(jnp.bfloat16)
    b1_big = jnp.tile(b1.astype(jnp.float32), (1, pack))
    b2_big = jnp.tile(b2p, (1, pack))
    return {"w1_big": w1_big, "b1_big": b1_big,
            "w2_big": w2_big, "b2_big": b2_big,
            "out_size": out_size}


def _choose_tiling(B, pack, tm_cap):
    """Pick a batch tile (in rows) that is a multiple of 16*pack, amortises
    per-step overhead, and gives >=2 (even) grid steps when possible so both
    v7x TensorCores are used on the 'parallel' axis."""
    unit = 16 * pack                       # bf16-sublane-friendly packed rows
    total_units = max(1, pl.cdiv(B, unit))
    cap_units = max(1, tm_cap // unit)
    if total_units <= cap_units:
        if total_units >= 2 and total_units % 2 == 0:
            tile_units = total_units // 2  # two parallel steps, no extra pad
        else:
            tile_units = total_units       # single tile (tiny batches)
    else:
        n_tiles = pl.cdiv(total_units, cap_units)
        if n_tiles % 2:
            n_tiles += 1                   # even step count for megacore
        tile_units = pl.cdiv(total_units, n_tiles)
    tm = tile_units * unit
    grid_m = pl.cdiv(total_units, tile_units)
    return tm, grid_m, grid_m * tm


@partial(jax.jit, static_argnames=("out_size", "tm_cap"))
def _forward_impl(x, w1_big, b1_big, w2_big, b2_big, *, out_size, tm_cap):
    B, in_size = x.shape
    pack = w1_big.shape[0] // in_size
    hidden = w1_big.shape[1] // pack
    out_cols = w2_big.shape[1]             # pack * out_p (== 128 when out<=128)
    out_p = out_cols // pack

    tm, grid_m, B_pad = _choose_tiling(B, pack, tm_cap)
    rows = tm // pack                       # packed rows per grid step

    # Cast to bf16 BEFORE padding/packing so x is never materialised twice in
    # f32; pad + reshape fuse under jit.  The reshape is a pure row-major
    # regrouping: packed row p holds original rows [p*pack, (p+1)*pack).
    x_bf = x.astype(jnp.bfloat16)
    if B_pad != B:
        x_bf = jnp.pad(x_bf, ((0, B_pad - B), (0, 0)))
    x_packed = x_bf.reshape(B_pad // pack, pack * in_size)

    flops = 2 * B_pad * in_size * (pack * hidden) + 2 * B_pad * hidden * out_cols
    bytes_accessed = (x_packed.size * 2
                      + w1_big.size * 2 + b1_big.size * 4
                      + w2_big.size * 2 + b2_big.size * 4
                      + (B_pad // pack) * out_cols * 4)

    # NOTE: resident weights could use pipeline_mode=pl.Buffered(1) to save a
    # little VMEM; skipped here since VMEM is far from the limit at tm_cap.
    out_packed = pl.pallas_call(
        mlp_packed_kernel,
        out_shape=jax.ShapeDtypeStruct((B_pad // pack, out_cols), jnp.float32),
        grid=(grid_m,),
        in_specs=[
            # Streamed (double-buffered) activations:
            pl.BlockSpec((rows, pack * in_size), lambda i: (i, 0)),
            # Resident weights / biases (constant index_map -> DMA'd once):
            pl.BlockSpec(w1_big.shape, lambda i: (0, 0)),
            pl.BlockSpec(b1_big.shape, lambda i: (0, 0)),
            pl.BlockSpec(w2_big.shape, lambda i: (0, 0)),
            pl.BlockSpec(b2_big.shape, lambda i: (0, 0)),
        ],
        out_specs=pl.BlockSpec((rows, out_cols), lambda i: (i, 0)),
        compiler_params=pltpu.CompilerParams(
            dimension_semantics=("parallel",)),
        cost_estimate=pl.CostEstimate(
            flops=flops, transcendentals=0, bytes_accessed=bytes_accessed),
    )(x_packed, w1_big, b1_big, w2_big, b2_big)

    # Unpack: (B_pad//pack, pack*out_p) -> (B_pad, out_p); drop padded rows/cols.
    return out_packed.reshape(B_pad, out_p)[:B, :out_size]


def stock_predictor_forward(x, params, *, tm_cap=8192):
    """Pallas forward of StockPredictor.  x: (B, input_size) f32 (already flat;
    x.view(B, -1) is a no-op for 2-D input).  Returns (B, output_size) f32."""
    B = x.shape[0]
    x = x.reshape(B, -1)                    # mirrors x.view(x.size(0), -1)
    return _forward_impl(x, params["w1_big"], params["b1_big"],
                         params["w2_big"], params["b2_big"],
                         out_size=params["out_size"], tm_cap=tm_cap)


# --------------------------------------------------------------------------
# Init + references
# --------------------------------------------------------------------------
def init_linear_params(key, fan_in, fan_out):
    """PyTorch nn.Linear init: U(-1/sqrt(fan_in), +1/sqrt(fan_in))."""
    kw, kb = jax.random.split(key)
    bound = 1.0 / math.sqrt(fan_in)
    w = jax.random.uniform(kw, (fan_in, fan_out), jnp.float32, -bound, bound)
    b = jax.random.uniform(kb, (1, fan_out), jnp.float32, -bound, bound)
    return w, b


def reference_forward_bf16(x, w1, b1, w2, b2):
    """Reference with the same bf16-operand / f32-accumulate recipe."""
    h = jnp.dot(x.astype(jnp.bfloat16), w1.astype(jnp.bfloat16),
                preferred_element_type=jnp.float32)
    h = jnp.maximum(h + b1, 0.0)
    y = jnp.dot(h.astype(jnp.bfloat16), w2.astype(jnp.bfloat16),
                preferred_element_type=jnp.float32)
    return y + b2


def reference_forward_f32(x, w1, b1, w2, b2):
    h = jnp.maximum(x @ w1 + b1, 0.0)
    return h @ w2 + b2


if __name__ == "__main__":
    # StockPredictor(input_size=16, hidden_size=32, output_size=4), batch=8.
    input_size, hidden_size, output_size = 16, 32, 4
    batch = 8

    key = jax.random.PRNGKey(0)
    kx, k1, k2 = jax.random.split(key, 3)

    x = jax.random.normal(kx, (batch, input_size), jnp.float32)
    w1, b1 = init_linear_params(k1, input_size, hidden_size)
    w2, b2 = init_linear_params(k2, hidden_size, output_size)

    params = prepare_params(w1, b1, w2, b2)      # one-time weight prep

    out = stock_predictor_forward(x, params)
    out = jax.block_until_ready(out)

    ref_bf16 = reference_forward_bf16(x, w1, b1, w2, b2)
    ref_f32 = reference_forward_f32(x, w1, b1, w2, b2)

    assert out.shape == (batch, output_size)
    # Tight check vs a reference using the same bf16-matmul / f32-accum recipe.
    assert jnp.allclose(out, ref_bf16, atol=2e-3, rtol=2e-3), "mismatch vs bf16 reference"
    # Looser sanity check vs the pure-f32 PyTorch-equivalent math.
    assert jnp.allclose(out, ref_f32, atol=5e-2, rtol=5e-2), "mismatch vs f32 reference"

    print("KERNEL_OK")
</pallas_src>

<mosaic_0001>
module attributes {stable_mosaic.version = 11 : i64} {
  func.func @mlp_packed_kernel(%arg0: i32, %arg1: memref<16x512xbf16, #tpu.memory_space<vmem>>, %arg2: memref<512x1024xbf16, #tpu.memory_space<vmem>>, %arg3: memref<1x1024xf32, #tpu.memory_space<vmem>>, %arg4: memref<1024x128xbf16, #tpu.memory_space<vmem>>, %arg5: memref<1x128xf32, #tpu.memory_space<vmem>>, %arg6: memref<16x128xf32, #tpu.memory_space<vmem>>) attributes {dimension_semantics = [#tpu.dimension_semantics<parallel>], iteration_bounds = array<i64: 1>, scalar_prefetch = 0 : i64, scratch_operands = 0 : i64, tpu.core_type = #tpu.core_type<tc>, window_params = [{transform_indices = @transform_0, window_bounds = array<i64: 16, 512>}, {pipeline_mode = #tpu.pipeline_mode<synchronous>, transform_indices = @transform_1, window_bounds = array<i64: 512, 1024>}, {pipeline_mode = #tpu.pipeline_mode<synchronous>, transform_indices = @transform_2, window_bounds = array<i64: 1, 1024>}, {pipeline_mode = #tpu.pipeline_mode<synchronous>, transform_indices = @transform_3, window_bounds = array<i64: 1024, 128>}, {pipeline_mode = #tpu.pipeline_mode<synchronous>, transform_indices = @transform_4, window_bounds = array<i64: 1, 128>}, {transform_indices = @transform_5, window_bounds = array<i64: 16, 128>}]} {
    %c0 = arith.constant 0 : index
    %c0_0 = arith.constant 0 : index
    %0 = vector.load %arg1[%c0, %c0_0] : memref<16x512xbf16, #tpu.memory_space<vmem>>, vector<16x512xbf16>
    %c0_1 = arith.constant 0 : index
    %c0_2 = arith.constant 0 : index
    %1 = vector.load %arg2[%c0_1, %c0_2] : memref<512x1024xbf16, #tpu.memory_space<vmem>>, vector<512x1024xbf16>
    %cst = arith.constant dense<0.000000e+00> : vector<16x1024xf32>
    %2 = tpu.matmul %0, %1, %cst {dimension_numbers = #tpu.dot_dimension_numbers<[1], [0], [0], [1], [0, 0, 1, 1], [], []>} : vector<16x512xbf16>, vector<512x1024xbf16>, vector<16x1024xf32> -> vector<16x1024xf32>
    %c0_3 = arith.constant 0 : index
    %c0_4 = arith.constant 0 : index
    %3 = vector.load %arg3[%c0_3, %c0_4] : memref<1x1024xf32, #tpu.memory_space<vmem>>, vector<1x1024xf32>
    %4 = vector.broadcast %3 : vector<1x1024xf32> to vector<16x1024xf32>
    %5 = arith.addf %2, %4 : vector<16x1024xf32>
    %cst_5 = arith.constant 0.000000e+00 : f32
    %6 = vector.broadcast %cst_5 : f32 to vector<16x1024xf32>
    %7 = arith.maximumf %5, %6 : vector<16x1024xf32>
    %8 = arith.truncf %7 : vector<16x1024xf32> to vector<16x1024xbf16>
    %c0_6 = arith.constant 0 : index
    %c0_7 = arith.constant 0 : index
    %9 = vector.load %arg4[%c0_6, %c0_7] : memref<1024x128xbf16, #tpu.memory_space<vmem>>, vector<1024x128xbf16>
    %cst_8 = arith.constant dense<0.000000e+00> : vector<16x128xf32>
    %10 = tpu.matmul %8, %9, %cst_8 {dimension_numbers = #tpu.dot_dimension_numbers<[1], [0], [0], [1], [0, 0, 1, 1], [], []>} : vector<16x1024xbf16>, vector<1024x128xbf16>, vector<16x128xf32> -> vector<16x128xf32>
    %c0_9 = arith.constant 0 : index
    %c0_10 = arith.constant 0 : index
    %11 = vector.load %arg5[%c0_9, %c0_10] : memref<1x128xf32, #tpu.memory_space<vmem>>, vector<1x128xf32>
    %12 = vector.broadcast %11 : vector<1x128xf32> to vector<16x128xf32>
    %13 = arith.addf %10, %12 : vector<16x128xf32>
    %c0_11 = arith.constant 0 : index
    %c0_12 = arith.constant 0 : index
    %14 = vector.load %arg6[%c0_11, %c0_12] : memref<16x128xf32, #tpu.memory_space<vmem>>, vector<16x128xf32>
    tpu.vector_store %arg6[%c0_11, %c0_12], %13 {strides = array<i32>} : memref<16x128xf32, #tpu.memory_space<vmem>>, vector<16x128xf32>,
    return
  }
  func.func @transform_0(%arg0: i32) -> (i32, i32) {
    %c0_i32 = arith.constant 0 : i32
    %c0_i32_0 = arith.constant 0 : i32
    return %arg0, %c0_i32 : i32, i32
  }
  func.func @transform_1(%arg0: i32) -> (i32, i32) {
    %c0_i32 = arith.constant 0 : i32
    %c0_i32_0 = arith.constant 0 : i32
    %c0_i32_1 = arith.constant 0 : i32
    return %c0_i32, %c0_i32_0 : i32, i32
  }
  func.func @transform_2(%arg0: i32) -> (i32, i32) {
    %c0_i32 = arith.constant 0 : i32
    %c0_i32_0 = arith.constant 0 : i32
    %c0_i32_1 = arith.constant 0 : i32
    return %c0_i32, %c0_i32_0 : i32, i32
  }
  func.func @transform_3(%arg0: i32) -> (i32, i32) {
    %c0_i32 = arith.constant 0 : i32
    %c0_i32_0 = arith.constant 0 : i32
    %c0_i32_1 = arith.constant 0 : i32
    return %c0_i32, %c0_i32_0 : i32, i32
  }
  func.func @transform_4(%arg0: i32) -> (i32, i32) {
    %c0_i32 = arith.constant 0 : i32
    %c0_i32_0 = arith.constant 0 : i32
    %c0_i32_1 = arith.constant 0 : i32
    return %c0_i32, %c0_i32_0 : i32, i32
  }
  func.func @transform_5(%arg0: i32) -> (i32, i32) {
    %c0_i32 = arith.constant 0 : i32
    %c0_i32_0 = arith.constant 0 : i32
    return %arg0, %c0_i32 : i32, i32
  }
}

</mosaic_0001>

<llo_original>
// kernel: _forward_impl.1
$region0: #{_forward_impl.1}
  #allocation0 [shape = 'u32[]', space=smem, size = 0x4, offset = 0x4, fixed_abs, tag = 'smem constant byte address 0x4 - core index']
  #allocation1 [shape = 'u32[144,128]{1,0:T(1,128)}', space=vmem, size = 0x12000, scoped, tag = 'internal scratch']
  %s0 = inlined_call_operand.vmem [shape: bf16[16,512], index: 0, kind: input, shape index: {}]
  %s1 = inlined_call_operand.hbm [shape: bf16[512,1024], index: 1, kind: input, shape index: {}]
  %s2 = inlined_call_operand.vmem [shape: f32[1,1024], index: 2, kind: input, shape index: {}]
  %s3 = inlined_call_operand.vmem [shape: bf16[1024,128], index: 3, kind: input, shape index: {}]
  %s4 = inlined_call_operand.vmem [shape: f32[1,128], index: 4, kind: input, shape index: {}]
  %s5 = inlined_call_operand.vmem [shape: f32[16,128], index: 5, kind: output, shape index: {}]
  %s6 = sld [smem:[#allocation0]]
  $region34: #{_forward_impl.1} parent=0
    _
  %s8 = ssub.s32 1, %s6
  %s9 = scalar_select 0, %s8, %s6
  $region1: #{_forward_impl.1} parent=0
    #allocation2 [shape = 'u8[1048576]{0}', space=vmem, size = 0x100000, scoped, tag = 'input window, operand 1, single buffered']
    #allocation3 [shape = 's32[1]{0}', space=sflag, size = 0x4, scoped, tag = 'scoped memory for _forward_impl.1']
    %10 = vsyncpa [#allocation3], 0
    // Predicated region
    $region2: #{_forward_impl.1} parent=1 // pred_check
      _
    $region3: #{_forward_impl.1} parent=1 // pred_check_branch
      %12 = sbr.rel (0) target = $region5
    $region4: #{_forward_impl.1} parent=1 // pred_region
      _
    $region5: #{_forward_impl.1} parent=1 // pred_fallthru
      _
    // Predicated region
    $region6: #{_forward_impl.1} parent=1 // pred_check
      _
    $region7: #{_forward_impl.1} parent=1 // pred_check_branch
      %14 = sbr.rel (0) target = $region9
    $region8: #{_forward_impl.1} parent=1 // pred_region
      %s16 = ssub.s32 32768, 32768
      %17 = vsyncadd [#allocation3], %s16
      %s18 = sshll.u32 [#allocation2], 4
      %s19 = int_to_ptr.vmem [resolvable:$true] %s18
      %24 = dma.hbm_to_vmem [thread:$0]  %s1, 32768, %s19, [#allocation3], 512, 512, 32
    $region9: #{_forward_impl.1} parent=1 // pred_fallthru
      _
    // Predicated region
    $region10: #{_forward_impl.1} parent=1 // pred_check
      _
    $region11: #{_forward_impl.1} parent=1 // pred_check_branch
      %26 = sbr.rel (0) target = $region13
    $region12: #{_forward_impl.1} parent=1 // pred_region
      _
    $region13: #{_forward_impl.1} parent=1 // pred_fallthru
      _
    // Predicated region
    $region14: #{_forward_impl.1} parent=1 // pred_check
      _
    $region15: #{_forward_impl.1} parent=1 // pred_check_branch
      %28 = sbr.rel (0) target = $region17
    $region16: #{_forward_impl.1} parent=1 // pred_region
      _
    $region17: #{_forward_impl.1} parent=1 // pred_fallthru
      _
    // Predicated region
    $region18: #{_forward_impl.1} parent=1 // pred_check
      _
    $region19: #{_forward_impl.1} parent=1 // pred_check_branch
      %30 = sbr.rel (0) target = $region21
    $region20: #{_forward_impl.1} parent=1 // pred_region
      _
    $region21: #{_forward_impl.1} parent=1 // pred_fallthru
      _
    // Predicated region
    $region22: #{_forward_impl.1} parent=1 // pred_check
      _
    $region23: #{_forward_impl.1} parent=1 // pred_check_branch
      %32 = sbr.rel (0) target = $region25
    $region24: #{_forward_impl.1} parent=1 // pred_region
      %33 = dma.done [#allocation3], 32768
    $region25: #{_forward_impl.1} parent=1 // pred_fallthru
      _
    %v35 = vld [vmem:[%s0] sm:$0xff]
    %v36 = vld [vmem:[%s0 + $0x8] sm:$0xff]
    %v37 = vld [vmem:[%s0 + $0x10] sm:$0xff]
    %v38 = vld [vmem:[%s0 + $0x18] sm:$0xff]
    %v39 = vld [vmem:[#allocation2] sm:$0xff]
    %v40 = vld [vmem:[#allocation2 + $0x8] sm:$0xff]
    %v41 = vld [vmem:[#allocation2 + $0x10] sm:$0xff]
    %v42 = vld [vmem:[#allocation2 + $0x18] sm:$0xff]
    %v43 = vld [vmem:[#allocation2 + $0x20] sm:$0xff]
    %v44 = vld [vmem:[#allocation2 + $0x28] sm:$0xff]
    %v45 = vld [vmem:[#allocation2 + $0x30] sm:$0xff]
    %v46 = vld [vmem:[#allocation2 + $0x38] sm:$0xff]
    %v47 = vld [vmem:[#allocation2 + $0x40] sm:$0xff]
    %v48 = vld [vmem:[#allocation2 + $0x48] sm:$0xff]
    %v49 = vld [vmem:[#allocation2 + $0x50] sm:$0xff]
    %v50 = vld [vmem:[#allocation2 + $0x58] sm:$0xff]
    %v51 = vld [vmem:[#allocation2 + $0x60] sm:$0xff]
    %v52 = vld [vmem:[#allocation2 + $0x68] sm:$0xff]
    %v53 = vld [vmem:[#allocation2 + $0x70] sm:$0xff]
    %v54 = vld [vmem:[#allocation2 + $0x78] sm:$0xff]
    %v55 = vld [vmem:[#allocation2 + $0x80] sm:$0xff]
    %v56 = vld [vmem:[#allocation2 + $0x88] sm:$0xff]
    %v57 = vld [vmem:[#allocation2 + $0x90] sm:$0xff]
    %v58 = vld [vmem:[#allocation2 + $0x98] sm:$0xff]
    %v59 = vld [vmem:[#allocation2 + $0xa0] sm:$0xff]
    %v60 = vld [vmem:[#allocation2 + $0xa8] sm:$0xff]
    %v61 = vld [vmem:[#allocation2 + $0xb0] sm:$0xff]
    %v62 = vld [vmem:[#allocation2 + $0xb8] sm:$0xff]
    %v63 = vld [vmem:[#allocation2 + $0xc0] sm:$0xff]
    %v64 = vld [vmem:[#allocation2 + $0xc8] sm:$0xff]
    %v65 = vld [vmem:[#allocation2 + $0xd0] sm:$0xff]
    %v66 = vld [vmem:[#allocation2 + $0xd8] sm:$0xff]
    %v67 = vld [vmem:[#allocation2 + $0xe0] sm:$0xff]
    %v68 = vld [vmem:[#allocation2 + $0xe8] sm:$0xff]
    %v69 = vld [vmem:[#allocation2 + $0xf0] sm:$0xff]
    %v70 = vld [vmem:[#allocation2 + $0xf8] sm:$0xff]
    %v71 = vld [vmem:[#allocation2 + $0x100] sm:$0xff]
    %v72 = vld [vmem:[#allocation2 + $0x108] sm:$0xff]
    %v73 = vld [vmem:[#allocation2 + $0x110] sm:$0xff]
    %v74 = vld [vmem:[#allocation2 + $0x118] sm:$0xff]
    %v75 = vld [vmem:[#allocation2 + $0x120] sm:$0xff]
    %v76 = vld [vmem:[#allocation2 + $0x128] sm:$0xff]
    %v77 = vld [vmem:[#allocation2 + $0x130] sm:$0xff]
    %v78 = vld [vmem:[#allocation2 + $0x138] sm:$0xff]
    %v79 = vld [vmem:[#allocation2 + $0x140] sm:$0xff]
    %v80 = vld [vmem:[#allocation2 + $0x148] sm:$0xff]
    %v81 = vld [vmem:[#allocation2 + $0x150] sm:$0xff]
    %v82 = vld [vmem:[#allocation2 + $0x158] sm:$0xff]
    %v83 = vld [vmem:[#allocation2 + $0x160] sm:$0xff]
    %v84 = vld [vmem:[#allocation2 + $0x168] sm:$0xff]
    %v85 = vld [vmem:[#allocation2 + $0x170] sm:$0xff]
    %v86 = vld [vmem:[#allocation2 + $0x178] sm:$0xff]
    %v87 = vld [vmem:[#allocation2 + $0x180] sm:$0xff]
    %v88 = vld [vmem:[#allocation2 + $0x188] sm:$0xff]
    %v89 = vld [vmem:[#allocation2 + $0x190] sm:$0xff]
    %v90 = vld [vmem:[#allocation2 + $0x198] sm:$0xff]
    %v91 = vld [vmem:[#allocation2 + $0x1a0] sm:$0xff]
    %v92 = vld [vmem:[#allocation2 + $0x1a8] sm:$0xff]
    %v93 = vld [vmem:[#allocation2 + $0x1b0] sm:$0xff]
    %v94 = vld [vmem:[#allocation2 + $0x1b8] sm:$0xff]
    %v95 = vld [vmem:[#allocation2 + $0x1c0] sm:$0xff]
    %v96 = vld [vmem:[#allocation2 + $0x1c8] sm:$0xff]
    %v97 = vld [vmem:[#allocation2 + $0x1d0] sm:$0xff]
    %v98 = vld [vmem:[#allocation2 + $0x1d8] sm:$0xff]
    %v99 = vld [vmem:[#allocation2 + $0x1e0] sm:$0xff]
    %v100 = vld [vmem:[#allocation2 + $0x1e8] sm:$0xff]
    %v101 = vld [vmem:[#allocation2 + $0x1f0] sm:$0xff]
    %v102 = vld [vmem:[#allocation2 + $0x1f8] sm:$0xff]
    %v103 = vld [vmem:[#allocation2 + $0x200] sm:$0xff]
    %v104 = vld [vmem:[#allocation2 + $0x208] sm:$0xff]
    %v105 = vld [vmem:[#allocation2 + $0x210] sm:$0xff]
    %v106 = vld [vmem:[#allocation2 + $0x218] sm:$0xff]
    %v107 = vld [vmem:[#allocation2 + $0x220] sm:$0xff]
    %v108 = vld [vmem:[#allocation2 + $0x228] sm:$0xff]
    %v109 = vld [vmem:[#allocation2 + $0x230] sm:$0xff]
    %v110 = vld [vmem:[#allocation2 + $0x238] sm:$0xff]
    %v111 = vld [vmem:[#allocation2 + $0x240] sm:$0xff]
    %v112 = vld [vmem:[#allocation2 + $0x248] sm:$0xff]
    %v113 = vld [vmem:[#allocation2 + $0x250] sm:$0xff]
    %v114 = vld [vmem:[#allocation2 + $0x258] sm:$0xff]
    %v115 = vld [vmem:[#allocation2 + $0x260] sm:$0xff]
    %v116 = vld [vmem:[#allocation2 + $0x268] sm:$0xff]
    %v117 = vld [vmem:[#allocation2 + $0x270] sm:$0xff]
    %v118 = vld [vmem:[#allocation2 + $0x278] sm:$0xff]
    %v119 = vld [vmem:[#allocation2 + $0x280] sm:$0xff]
    %v120 = vld [vmem:[#allocation2 + $0x288] sm:$0xff]
    %v121 = vld [vmem:[#allocation2 + $0x290] sm:$0xff]
    %v122 = vld [vmem:[#allocation2 + $0x298] sm:$0xff]
    %v123 = vld [vmem:[#allocation2 + $0x2a0] sm:$0xff]
    %v124 = vld [vmem:[#allocation2 + $0x2a8] sm:$0xff]
    %v125 = vld [vmem:[#allocation2 + $0x2b0] sm:$0xff]
    %v126 = vld [vmem:[#allocation2 + $0x2b8] sm:$0xff]
    %v127 = vld [vmem:[#allocation2 + $0x2c0] sm:$0xff]
    %v128 = vld [vmem:[#allocation2 + $0x2c8] sm:$0xff]
    %v129 = vld [vmem:[#allocation2 + $0x2d0] sm:$0xff]
    %v130 = vld [vmem:[#allocation2 + $0x2d8] sm:$0xff]
    %v131 = vld [vmem:[#allocation2 + $0x2e0] sm:$0xff]
    %v132 = vld [vmem:[#allocation2 + $0x2e8] sm:$0xff]
    %v133 = vld [vmem:[#allocation2 + $0x2f0] sm:$0xff]
    %v134 = vld [vmem:[#allocation2 + $0x2f8] sm:$0xff]
    %v135 = vld [vmem:[#allocation2 + $0x300] sm:$0xff]
    %v136 = vld [vmem:[#allocation2 + $0x308] sm:$0xff]
    %v137 = vld [vmem:[#allocation2 + $0x310] sm:$0xff]
    %v138 = vld [vmem:[#allocation2 + $0x318] sm:$0xff]
    %v139 = vld [vmem:[#allocation2 + $0x320] sm:$0xff]
    %v140 = vld [vmem:[#allocation2 + $0x328] sm:$0xff]
    %v141 = vld [vmem:[#allocation2 + $0x330] sm:$0xff]
    %v142 = vld [vmem:[#allocation2 + $0x338] sm:$0xff]
    %v143 = vld [vmem:[#allocation2 + $0x340] sm:$0xff]
    %v144 = vld [vmem:[#allocation2 + $0x348] sm:$0xff]
    %v145 = vld [vmem:[#allocation2 + $0x350] sm:$0xff]
    %v146 = vld [vmem:[#allocation2 + $0x358] sm:$0xff]
    %v147 = vld [vmem:[#allocation2 + $0x360] sm:$0xff]
    %v148 = vld [vmem:[#allocation2 + $0x368] sm:$0xff]
    %v149 = vld [vmem:[#allocation2 + $0x370] sm:$0xff]
    %v150 = vld [vmem:[#allocation2 + $0x378] sm:$0xff]
    %v151 = vld [vmem:[#allocation2 + $0x380] sm:$0xff]
    %v152 = vld [vmem:[#allocation2 + $0x388] sm:$0xff]
    %v153 = vld [vmem:[#allocation2 + $0x390] sm:$0xff]
    %v154 = vld [vmem:[#allocation2 + $0x398] sm:$0xff]
    %v155 = vld [vmem:[#allocation2 + $0x3a0] sm:$0xff]
    %v156 = vld [vmem:[#allocation2 + $0x3a8] sm:$0xff]
    %v157 = vld [vmem:[#allocation2 + $0x3b0] sm:$0xff]
    %v158 = vld [vmem:[#allocation2 + $0x3b8] sm:$0xff]
    %v159 = vld [vmem:[#allocation2 + $0x3c0] sm:$0xff]
    %v160 = vld [vmem:[#allocation2 + $0x3c8] sm:$0xff]
    %v161 = vld [vmem:[#allocation2 + $0x3d0] sm:$0xff]
    %v162 = vld [vmem:[#allocation2 + $0x3d8] sm:$0xff]
    %v163 = vld [vmem:[#allocation2 + $0x3e0] sm:$0xff]
    %v164 = vld [vmem:[#allocation2 + $0x3e8] sm:$0xff]
    %v165 = vld [vmem:[#allocation2 + $0x3f0] sm:$0xff]
    %v166 = vld [vmem:[#allocation2 + $0x3f8] sm:$0xff]
    %v167 = vld [vmem:[#allocation2 + $0x400] sm:$0xff]
    %v168 = vld [vmem:[#allocation2 + $0x408] sm:$0xff]
    %v169 = vld [vmem:[#allocation2 + $0x410] sm:$0xff]
    %v170 = vld [vmem:[#allocation2 + $0x418] sm:$0xff]
    %v171 = vld [vmem:[#allocation2 + $0x420] sm:$0xff]
    %v172 = vld [vmem:[#allocation2 + $0x428] sm:$0xff]
    %v173 = vld [vmem:[#allocation2 + $0x430] sm:$0xff]
    %v174 = vld [vmem:[#allocation2 + $0x438] sm:$0xff]
    %v175 = vld [vmem:[#allocation2 + $0x440] sm:$0xff]
    %v176 = vld [vmem:[#allocation2 + $0x448] sm:$0xff]
    %v177 = vld [vmem:[#allocation2 + $0x450] sm:$0xff]
    %v178 = vld [vmem:[#allocation2 + $0x458] sm:$0xff]
    %v179 = vld [vmem:[#allocation2 + $0x460] sm:$0xff]
    %v180 = vld [vmem:[#allocation2 + $0x468] sm:$0xff]
    %v181 = vld [vmem:[#allocation2 + $0x470] sm:$0xff]
    %v182 = vld [vmem:[#allocation2 + $0x478] sm:$0xff]
    %v183 = vld [vmem:[#allocation2 + $0x480] sm:$0xff]
    %v184 = vld [vmem:[#allocation2 + $0x488] sm:$0xff]
    %v185 = vld [vmem:[#allocation2 + $0x490] sm:$0xff]
    %v186 = vld [vmem:[#allocation2 + $0x498] sm:$0xff]
    %v187 = vld [vmem:[#allocation2 + $0x4a0] sm:$0xff]
    %v188 = vld [vmem:[#allocation2 + $0x4a8] sm:$0xff]
    %v189 = vld [vmem:[#allocation2 + $0x4b0] sm:$0xff]
    %v190 = vld [vmem:[#allocation2 + $0x4b8] sm:$0xff]
    %v191 = vld [vmem:[#allocation2 + $0x4c0] sm:$0xff]
    %v192 = vld [vmem:[#allocation2 + $0x4c8] sm:$0xff]
    %v193 = vld [vmem:[#allocation2 + $0x4d0] sm:$0xff]
    %v194 = vld [vmem:[#allocation2 + $0x4d8] sm:$0xff]
    %v195 = vld [vmem:[#allocation2 + $0x4e0] sm:$0xff]
    %v196 = vld [vmem:[#allocation2 + $0x4e8] sm:$0xff]
    %v197 = vld [vmem:[#allocation2 + $0x4f0] sm:$0xff]
    %v198 = vld [vmem:[#allocation2 + $0x4f8] sm:$0xff]
    %v199 = vld [vmem:[#allocation2 + $0x500] sm:$0xff]
    %v200 = vld [vmem:[#allocation2 + $0x508] sm:$0xff]
    %v201 = vld [vmem:[#allocation2 + $0x510] sm:$0xff]
    %v202 = vld [vmem:[#allocation2 + $0x518] sm:$0xff]
    %v203 = vld [vmem:[#allocation2 + $0x520] sm:$0xff]
    %v204 = vld [vmem:[#allocation2 + $0x528] sm:$0xff]
    %v205 = vld [vmem:[#allocation2 + $0x530] sm:$0xff]
    %v206 = vld [vmem:[#allocation2 + $0x538] sm:$0xff]
    %v207 = vld [vmem:[#allocation2 + $0x540] sm:$0xff]
    %v208 = vld [vmem:[#allocation2 + $0x548] sm:$0xff]
    %v209 = vld [vmem:[#allocation2 + $0x550] sm:$0xff]
    %v210 = vld [vmem:[#allocation2 + $0x558] sm:$0xff]
    %v211 = vld [vmem:[#allocation2 + $0x560] sm:$0xff]
    %v212 = vld [vmem:[#allocation2 + $0x568] sm:$0xff]
    %v213 = vld [vmem:[#allocation2 + $0x570] sm:$0xff]
    %v214 = vld [vmem:[#allocation2 + $0x578] sm:$0xff]
    %v215 = vld [vmem:[#allocation2 + $0x580] sm:$0xff]
    %v216 = vld [vmem:[#allocation2 + $0x588] sm:$0xff]
    %v217 = vld [vmem:[#allocation2 + $0x590] sm:$0xff]
    %v218 = vld [vmem:[#allocation2 + $0x598] sm:$0xff]
    %v219 = vld [vmem:[#allocation2 + $0x5a0] sm:$0xff]
    %v220 = vld [vmem:[#allocation2 + $0x5a8] sm:$0xff]
    %v221 = vld [vmem:[#allocation2 + $0x5b0] sm:$0xff]
    %v222 = vld [vmem:[#allocation2 + $0x5b8] sm:$0xff]
    %v223 = vld [vmem:[#allocation2 + $0x5c0] sm:$0xff]
    %v224 = vld [vmem:[#allocation2 + $0x5c8] sm:$0xff]
    %v225 = vld [vmem:[#allocation2 + $0x5d0] sm:$0xff]
    %v226 = vld [vmem:[#allocation2 + $0x5d8] sm:$0xff]
    %v227 = vld [vmem:[#allocation2 + $0x5e0] sm:$0xff]
    %v228 = vld [vmem:[#allocation2 + $0x5e8] sm:$0xff]
    %v229 = vld [vmem:[#allocation2 + $0x5f0] sm:$0xff]
    %v230 = vld [vmem:[#allocation2 + $0x5f8] sm:$0xff]
    %v231 = vld [vmem:[#allocation2 + $0x600] sm:$0xff]
    %v232 = vld [vmem:[#allocation2 + $0x608] sm:$0xff]
    %v233 = vld [vmem:[#allocation2 + $0x610] sm:$0xff]
    %v234 = vld [vmem:[#allocation2 + $0x618] sm:$0xff]
    %v235 = vld [vmem:[#allocation2 + $0x620] sm:$0xff]
    %v236 = vld [vmem:[#allocation2 + $0x628] sm:$0xff]
    %v237 = vld [vmem:[#allocation2 + $0x630] sm:$0xff]
    %v238 = vld [vmem:[#allocation2 + $0x638] sm:$0xff]
    %v239 = vld [vmem:[#allocation2 + $0x640] sm:$0xff]
    %v240 = vld [vmem:[#allocation2 + $0x648] sm:$0xff]
    %v241 = vld [vmem:[#allocation2 + $0x650] sm:$0xff]
    %v242 = vld [vmem:[#allocation2 + $0x658] sm:$0xff]
    %v243 = vld [vmem:[#allocation2 + $0x660] sm:$0xff]
    %v244 = vld [vmem:[#allocation2 + $0x668] sm:$0xff]
    %v245 = vld [vmem:[#allocation2 + $0x670] sm:$0xff]
    %v246 = vld [vmem:[#allocation2 + $0x678] sm:$0xff]
    %v247 = vld [vmem:[#allocation2 + $0x680] sm:$0xff]
    %v248 = vld [vmem:[#allocation2 + $0x688] sm:$0xff]
    %v249 = vld [vmem:[#allocation2 + $0x690] sm:$0xff]
    %v250 = vld [vmem:[#allocation2 + $0x698] sm:$0xff]
    %v251 = vld [vmem:[#allocation2 + $0x6a0] sm:$0xff]
    %v252 = vld [vmem:[#allocation2 + $0x6a8] sm:$0xff]
    %v253 = vld [vmem:[#allocation2 + $0x6b0] sm:$0xff]
    %v254 = vld [vmem:[#allocation2 + $0x6b8] sm:$0xff]
    %v255 = vld [vmem:[#allocation2 + $0x6c0] sm:$0xff]
    %v256 = vld [vmem:[#allocation2 + $0x6c8] sm:$0xff]
    %v257 = vld [vmem:[#allocation2 + $0x6d0] sm:$0xff]
    %v258 = vld [vmem:[#allocation2 + $0x6d8] sm:$0xff]
    %v259 = vld [vmem:[#allocation2 + $0x6e0] sm:$0xff]
    %v260 = vld [vmem:[#allocation2 + $0x6e8] sm:$0xff]
    %v261 = vld [vmem:[#allocation2 + $0x6f0] sm:$0xff]
    %v262 = vld [vmem:[#allocation2 + $0x6f8] sm:$0xff]
    %v263 = vld [vmem:[#allocation2 + $0x700] sm:$0xff]
    %v264 = vld [vmem:[#allocation2 + $0x708] sm:$0xff]
    %v265 = vld [vmem:[#allocation2 + $0x710] sm:$0xff]
    %v266 = vld [vmem:[#allocation2 + $0x718] sm:$0xff]
    %v267 = vld [vmem:[#allocation2 + $0x720] sm:$0xff]
    %v268 = vld [vmem:[#allocation2 + $0x728] sm:$0xff]
    %v269 = vld [vmem:[#allocation2 + $0x730] sm:$0xff]
    %v270 = vld [vmem:[#allocation2 + $0x738] sm:$0xff]
    %v271 = vld [vmem:[#allocation2 + $0x740] sm:$0xff]
    %v272 = vld [vmem:[#allocation2 + $0x748] sm:$0xff]
    %v273 = vld [vmem:[#allocation2 + $0x750] sm:$0xff]
    %v274 = vld [vmem:[#allocation2 + $0x758] sm:$0xff]
    %v275 = vld [vmem:[#allocation2 + $0x760] sm:$0xff]
    %v276 = vld [vmem:[#allocation2 + $0x768] sm:$0xff]
    %v277 = vld [vmem:[#allocation2 + $0x770] sm:$0xff]
    %v278 = vld [vmem:[#allocation2 + $0x778] sm:$0xff]
    %v279 = vld [vmem:[#allocation2 + $0x780] sm:$0xff]
    %v280 = vld [vmem:[#allocation2 + $0x788] sm:$0xff]
    %v281 = vld [vmem:[#allocation2 + $0x790] sm:$0xff]
    %v282 = vld [vmem:[#allocation2 + $0x798] sm:$0xff]
    %v283 = vld [vmem:[#allocation2 + $0x7a0] sm:$0xff]
    %v284 = vld [vmem:[#allocation2 + $0x7a8] sm:$0xff]
    %v285 = vld [vmem:[#allocation2 + $0x7b0] sm:$0xff]
    %v286 = vld [vmem:[#allocation2 + $0x7b8] sm:$0xff]
    %v287 = vld [vmem:[#allocation2 + $0x7c0] sm:$0xff]
    %v288 = vld [vmem:[#allocation2 + $0x7c8] sm:$0xff]
    %v289 = vld [vmem:[#allocation2 + $0x7d0] sm:$0xff]
    %v290 = vld [vmem:[#allocation2 + $0x7d8] sm:$0xff]
    %v291 = vld [vmem:[#allocation2 + $0x7e0] sm:$0xff]
    %v292 = vld [vmem:[#allocation2 + $0x7e8] sm:$0xff]
    %v293 = vld [vmem:[#allocation2 + $0x7f0] sm:$0xff]
    %v294 = vld [vmem:[#allocation2 + $0x7f8] sm:$0xff]
    %v295 = vld [vmem:[%s2] sm:$0xff]
    %v297 = vlaneseq
    %v298 = vshrl.u32 %v297, 7
    %v299 = vsub.s32 0, %v298
    %v300 = vrot.slane %v295, %v299
    %v301 = vlaneseq
    %v302 = vshrl.u32 %v301, 7
    %v303 = vsub.s32 1, %v302
    %v304 = vrot.slane %v295, %v303
    %v305 = vlaneseq
    %v306 = vshrl.u32 %v305, 7
    %v307 = vsub.s32 2, %v306
    %v308 = vrot.slane %v295, %v307
    %v309 = vlaneseq
    %v310 = vshrl.u32 %v309, 7
    %v311 = vsub.s32 3, %v310
    %v312 = vrot.slane %v295, %v311
    %v313 = vlaneseq
    %v314 = vshrl.u32 %v313, 7
    %v315 = vsub.s32 4, %v314
    %v316 = vrot.slane %v295, %v315
    %v317 = vlaneseq
    %v318 = vshrl.u32 %v317, 7
    %v319 = vsub.s32 5, %v318
    %v320 = vrot.slane %v295, %v319
    %v321 = vlaneseq
    %v322 = vshrl.u32 %v321, 7
    %v323 = vsub.s32 6, %v322
    %v324 = vrot.slane %v295, %v323
    %v325 = vlaneseq
    %v326 = vshrl.u32 %v325, 7
    %v327 = vsub.s32 7, %v326
    %v328 = vrot.slane %v295, %v327
    %v341 = vunpack.c.l.b16 %v35
    %v342 = vunpack.c.h.b16 %v35
    %v343 = vunpack.c.l.b16 %v36
    %v344 = vunpack.c.h.b16 %v36
    %v345 = vunpack.c.l.b16 %v37
    %v346 = vunpack.c.h.b16 %v37
    %v347 = vunpack.c.l.b16 %v38
    %v348 = vunpack.c.h.b16 %v38
    %v349 = vpack.c.b16 %v345, %v341
    %v350 = vpack.c.b16 %v346, %v342
    %v351 = vpack.c.b16 %v347, %v343
    %v352 = vpack.c.b16 %v348, %v344
    %v613 = vunpack.c.l.b16 %v39
    %v614 = vunpack.c.h.b16 %v39
    %v615 = vunpack.c.l.b16 %v40
    %v616 = vunpack.c.h.b16 %v40
    %v617 = vunpack.c.l.b16 %v41
    %v618 = vunpack.c.h.b16 %v41
    %v619 = vunpack.c.l.b16 %v42
    %v620 = vunpack.c.h.b16 %v42
    %v621 = vunpack.c.l.b16 %v43
    %v622 = vunpack.c.h.b16 %v43
    %v623 = vunpack.c.l.b16 %v44
    %v624 = vunpack.c.h.b16 %v44
    %v625 = vunpack.c.l.b16 %v45
    %v626 = vunpack.c.h.b16 %v45
    %v627 = vunpack.c.l.b16 %v46
    %v628 = vunpack.c.h.b16 %v46
    %v629 = vunpack.c.l.b16 %v47
    %v630 = vunpack.c.h.b16 %v47
    %v631 = vunpack.c.l.b16 %v48
    %v632 = vunpack.c.h.b16 %v48
    %v633 = vunpack.c.l.b16 %v49
    %v634 = vunpack.c.h.b16 %v49
    %v635 = vunpack.c.l.b16 %v50
    %v636 = vunpack.c.h.b16 %v50
    %v637 = vunpack.c.l.b16 %v51
    %v638 = vunpack.c.h.b16 %v51
    %v639 = vunpack.c.l.b16 %v52
    %v640 = vunpack.c.h.b16 %v52
    %v641 = vunpack.c.l.b16 %v53
    %v642 = vunpack.c.h.b16 %v53
    %v643 = vunpack.c.l.b16 %v54
    %v644 = vunpack.c.h.b16 %v54
    %v645 = vunpack.c.l.b16 %v55
    %v646 = vunpack.c.h.b16 %v55
    %v647 = vunpack.c.l.b16 %v56
    %v648 = vunpack.c.h.b16 %v56
    %v649 = vunpack.c.l.b16 %v57
    %v650 = vunpack.c.h.b16 %v57
    %v651 = vunpack.c.l.b16 %v58
    %v652 = vunpack.c.h.b16 %v58
    %v653 = vunpack.c.l.b16 %v59
    %v654 = vunpack.c.h.b16 %v59
    %v655 = vunpack.c.l.b16 %v60
    %v656 = vunpack.c.h.b16 %v60
    %v657 = vunpack.c.l.b16 %v61
    %v658 = vunpack.c.h.b16 %v61
    %v659 = vunpack.c.l.b16 %v62
    %v660 = vunpack.c.h.b16 %v62
    %v661 = vunpack.c.l.b16 %v63
    %v662 = vunpack.c.h.b16 %v63
    %v663 = vunpack.c.l.b16 %v64
    %v664 = vunpack.c.h.b16 %v64
    %v665 = vunpack.c.l.b16 %v65
    %v666 = vunpack.c.h.b16 %v65
    %v667 = vunpack.c.l.b16 %v66
    %v668 = vunpack.c.h.b16 %v66
    %v669 = vunpack.c.l.b16 %v67
    %v670 = vunpack.c.h.b16 %v67
    %v671 = vunpack.c.l.b16 %v68
    %v672 = vunpack.c.h.b16 %v68
    %v673 = vunpack.c.l.b16 %v69
    %v674 = vunpack.c.h.b16 %v69
    %v675 = vunpack.c.l.b16 %v70
    %v676 = vunpack.c.h.b16 %v70
    %v677 = vunpack.c.l.b16 %v71
    %v678 = vunpack.c.h.b16 %v71
    %v679 = vunpack.c.l.b16 %v72
    %v680 = vunpack.c.h.b16 %v72
    %v681 = vunpack.c.l.b16 %v73
    %v682 = vunpack.c.h.b16 %v73
    %v683 = vunpack.c.l.b16 %v74
    %v684 = vunpack.c.h.b16 %v74
    %v685 = vunpack.c.l.b16 %v75
    %v686 = vunpack.c.h.b16 %v75
    %v687 = vunpack.c.l.b16 %v76
    %v688 = vunpack.c.h.b16 %v76
    %v689 = vunpack.c.l.b16 %v77
    %v690 = vunpack.c.h.b16 %v77
    %v691 = vunpack.c.l.b16 %v78
    %v692 = vunpack.c.h.b16 %v78
    %v693 = vunpack.c.l.b16 %v79
    %v694 = vunpack.c.h.b16 %v79
    %v695 = vunpack.c.l.b16 %v80
    %v696 = vunpack.c.h.b16 %v80
    %v697 = vunpack.c.l.b16 %v81
    %v698 = vunpack.c.h.b16 %v81
    %v699 = vunpack.c.l.b16 %v82
    %v700 = vunpack.c.h.b16 %v82
    %v701 = vunpack.c.l.b16 %v83
    %v702 = vunpack.c.h.b16 %v83
    %v703 = vunpack.c.l.b16 %v84
    %v704 = vunpack.c.h.b16 %v84
    %v705 = vunpack.c.l.b16 %v85
    %v706 = vunpack.c.h.b16 %v85
    %v707 = vunpack.c.l.b16 %v86
    %v708 = vunpack.c.h.b16 %v86
    %v709 = vunpack.c.l.b16 %v87
    %v710 = vunpack.c.h.b16 %v87
    %v711 = vunpack.c.l.b16 %v88
    %v712 = vunpack.c.h.b16 %v88
    %v713 = vunpack.c.l.b16 %v89
    %v714 = vunpack.c.h.b16 %v89
    %v715 = vunpack.c.l.b16 %v90
    %v716 = vunpack.c.h.b16 %v90
    %v717 = vunpack.c.l.b16 %v91
    %v718 = vunpack.c.h.b16 %v91
    %v719 = vunpack.c.l.b16 %v92
    %v720 = vunpack.c.h.b16 %v92
    %v721 = vunpack.c.l.b16 %v93
    %v722 = vunpack.c.h.b16 %v93
    %v723 = vunpack.c.l.b16 %v94
    %v724 = vunpack.c.h.b16 %v94
    %v725 = vunpack.c.l.b16 %v95
    %v726 = vunpack.c.h.b16 %v95
    %v727 = vunpack.c.l.b16 %v96
    %v728 = vunpack.c.h.b16 %v96
    %v729 = vunpack.c.l.b16 %v97
    %v730 = vunpack.c.h.b16 %v97
    %v731 = vunpack.c.l.b16 %v98
    %v732 = vunpack.c.h.b16 %v98
    %v733 = vunpack.c.l.b16 %v99
    %v734 = vunpack.c.h.b16 %v99
    %v735 = vunpack.c.l.b16 %v100
    %v736 = vunpack.c.h.b16 %v100
    %v737 = vunpack.c.l.b16 %v101
    %v738 = vunpack.c.h.b16 %v101
    %v739 = vunpack.c.l.b16 %v102
    %v740 = vunpack.c.h.b16 %v102
    %v741 = vunpack.c.l.b16 %v103
    %v742 = vunpack.c.h.b16 %v103
    %v743 = vunpack.c.l.b16 %v104
    %v744 = vunpack.c.h.b16 %v104
    %v745 = vunpack.c.l.b16 %v105
    %v746 = vunpack.c.h.b16 %v105
    %v747 = vunpack.c.l.b16 %v106
    %v748 = vunpack.c.h.b16 %v106
    %v749 = vunpack.c.l.b16 %v107
    %v750 = vunpack.c.h.b16 %v107
    %v751 = vunpack.c.l.b16 %v108
    %v752 = vunpack.c.h.b16 %v108
    %v753 = vunpack.c.l.b16 %v109
    %v754 = vunpack.c.h.b16 %v109
    %v755 = vunpack.c.l.b16 %v110
    %v756 = vunpack.c.h.b16 %v110
    %v757 = vunpack.c.l.b16 %v111
    %v758 = vunpack.c.h.b16 %v111
    %v759 = vunpack.c.l.b16 %v112
    %v760 = vunpack.c.h.b16 %v112
    %v761 = vunpack.c.l.b16 %v113
    %v762 = vunpack.c.h.b16 %v113
    %v763 = vunpack.c.l.b16 %v114
    %v764 = vunpack.c.h.b16 %v114
    %v765 = vunpack.c.l.b16 %v115
    %v766 = vunpack.c.h.b16 %v115
    %v767 = vunpack.c.l.b16 %v116
    %v768 = vunpack.c.h.b16 %v116
    %v769 = vunpack.c.l.b16 %v117
    %v770 = vunpack.c.h.b16 %v117
    %v771 = vunpack.c.l.b16 %v118
    %v772 = vunpack.c.h.b16 %v118
    %v773 = vunpack.c.l.b16 %v119
    %v774 = vunpack.c.h.b16 %v119
    %v775 = vunpack.c.l.b16 %v120
    %v776 = vunpack.c.h.b16 %v120
    %v777 = vunpack.c.l.b16 %v121
    %v778 = vunpack.c.h.b16 %v121
    %v779 = vunpack.c.l.b16 %v122
    %v780 = vunpack.c.h.b16 %v122
    %v781 = vunpack.c.l.b16 %v123
    %v782 = vunpack.c.h.b16 %v123
    %v783 = vunpack.c.l.b16 %v124
    %v784 = vunpack.c.h.b16 %v124
    %v785 = vunpack.c.l.b16 %v125
    %v786 = vunpack.c.h.b16 %v125
    %v787 = vunpack.c.l.b16 %v126
    %v788 = vunpack.c.h.b16 %v126
    %v789 = vunpack.c.l.b16 %v127
    %v790 = vunpack.c.h.b16 %v127
    %v791 = vunpack.c.l.b16 %v128
    %v792 = vunpack.c.h.b16 %v128
    %v793 = vunpack.c.l.b16 %v129
    %v794 = vunpack.c.h.b16 %v129
    %v795 = vunpack.c.l.b16 %v130
    %v796 = vunpack.c.h.b16 %v130
    %v797 = vunpack.c.l.b16 %v131
    %v798 = vunpack.c.h.b16 %v131
    %v799 = vunpack.c.l.b16 %v132
    %v800 = vunpack.c.h.b16 %v132
    %v801 = vunpack.c.l.b16 %v133
    %v802 = vunpack.c.h.b16 %v133
    %v803 = vunpack.c.l.b16 %v134
    %v804 = vunpack.c.h.b16 %v134
    %v805 = vunpack.c.l.b16 %v135
    %v806 = vunpack.c.h.b16 %v135
    %v807 = vunpack.c.l.b16 %v136
    %v808 = vunpack.c.h.b16 %v136
    %v809 = vunpack.c.l.b16 %v137
    %v810 = vunpack.c.h.b16 %v137
    %v811 = vunpack.c.l.b16 %v138
    %v812 = vunpack.c.h.b16 %v138
    %v813 = vunpack.c.l.b16 %v139
    %v814 = vunpack.c.h.b16 %v139
    %v815 = vunpack.c.l.b16 %v140
    %v816 = vunpack.c.h.b16 %v140
    %v817 = vunpack.c.l.b16 %v141
    %v818 = vunpack.c.h.b16 %v141
    %v819 = vunpack.c.l.b16 %v142
    %v820 = vunpack.c.h.b16 %v142
    %v821 = vunpack.c.l.b16 %v143
    %v822 = vunpack.c.h.b16 %v143
    %v823 = vunpack.c.l.b16 %v144
    %v824 = vunpack.c.h.b16 %v144
    %v825 = vunpack.c.l.b16 %v145
    %v826 = vunpack.c.h.b16 %v145
    %v827 = vunpack.c.l.b16 %v146
    %v828 = vunpack.c.h.b16 %v146
    %v829 = vunpack.c.l.b16 %v147
    %v830 = vunpack.c.h.b16 %v147
    %v831 = vunpack.c.l.b16 %v148
    %v832 = vunpack.c.h.b16 %v148
    %v833 = vunpack.c.l.b16 %v149
    %v834 = vunpack.c.h.b16 %v149
    %v835 = vunpack.c.l.b16 %v150
    %v836 = vunpack.c.h.b16 %v150
    %v837 = vunpack.c.l.b16 %v151
    %v838 = vunpack.c.h.b16 %v151
    %v839 = vunpack.c.l.b16 %v152
    %v840 = vunpack.c.h.b16 %v152
    %v841 = vunpack.c.l.b16 %v153
    %v842 = vunpack.c.h.b16 %v153
    %v843 = vunpack.c.l.b16 %v154
    %v844 = vunpack.c.h.b16 %v154
    %v845 = vunpack.c.l.b16 %v155
    %v846 = vunpack.c.h.b16 %v155
    %v847 = vunpack.c.l.b16 %v156
    %v848 = vunpack.c.h.b16 %v156
    %v849 = vunpack.c.l.b16 %v157
    %v850 = vunpack.c.h.b16 %v157
    %v851 = vunpack.c.l.b16 %v158
    %v852 = vunpack.c.h.b16 %v158
    %v853 = vunpack.c.l.b16 %v159
    %v854 = vunpack.c.h.b16 %v159
    %v855 = vunpack.c.l.b16 %v160
    %v856 = vunpack.c.h.b16 %v160
    %v857 = vunpack.c.l.b16 %v161
    %v858 = vunpack.c.h.b16 %v161
    %v859 = vunpack.c.l.b16 %v162
    %v860 = vunpack.c.h.b16 %v162
    %v861 = vunpack.c.l.b16 %v163
    %v862 = vunpack.c.h.b16 %v163
    %v863 = vunpack.c.l.b16 %v164
    %v864 = vunpack.c.h.b16 %v164
    %v865 = vunpack.c.l.b16 %v165
    %v866 = vunpack.c.h.b16 %v165
    %v867 = vunpack.c.l.b16 %v166
    %v868 = vunpack.c.h.b16 %v166
    %v869 = vunpack.c.l.b16 %v167
    %v870 = vunpack.c.h.b16 %v167
    %v871 = vunpack.c.l.b16 %v168
    %v872 = vunpack.c.h.b16 %v168
    %v873 = vunpack.c.l.b16 %v169
    %v874 = vunpack.c.h.b16 %v169
    %v875 = vunpack.c.l.b16 %v170
    %v876 = vunpack.c.h.b16 %v170
    %v877 = vunpack.c.l.b16 %v171
    %v878 = vunpack.c.h.b16 %v171
    %v879 = vunpack.c.l.b16 %v172
    %v880 = vunpack.c.h.b16 %v172
    %v881 = vunpack.c.l.b16 %v173
    %v882 = vunpack.c.h.b16 %v173
    %v883 = vunpack.c.l.b16 %v174
    %v884 = vunpack.c.h.b16 %v174
    %v885 = vunpack.c.l.b16 %v175
    %v886 = vunpack.c.h.b16 %v175
    %v887 = vunpack.c.l.b16 %v176
    %v888 = vunpack.c.h.b16 %v176
    %v889 = vunpack.c.l.b16 %v177
    %v890 = vunpack.c.h.b16 %v177
    %v891 = vunpack.c.l.b16 %v178
    %v892 = vunpack.c.h.b16 %v178
    %v893 = vunpack.c.l.b16 %v179
    %v894 = vunpack.c.h.b16 %v179
    %v895 = vunpack.c.l.b16 %v180
    %v896 = vunpack.c.h.b16 %v180
    %v897 = vunpack.c.l.b16 %v181
    %v898 = vunpack.c.h.b16 %v181
    %v899 = vunpack.c.l.b16 %v182
    %v900 = vunpack.c.h.b16 %v182
    %v901 = vunpack.c.l.b16 %v183
    %v902 = vunpack.c.h.b16 %v183
    %v903 = vunpack.c.l.b16 %v184
    %v904 = vunpack.c.h.b16 %v184
    %v905 = vunpack.c.l.b16 %v185
    %v906 = vunpack.c.h.b16 %v185
    %v907 = vunpack.c.l.b16 %v186
    %v908 = vunpack.c.h.b16 %v186
    %v909 = vunpack.c.l.b16 %v187
    %v910 = vunpack.c.h.b16 %v187
    %v911 = vunpack.c.l.b16 %v188
    %v912 = vunpack.c.h.b16 %v188
    %v913 = vunpack.c.l.b16 %v189
    %v914 = vunpack.c.h.b16 %v189
    %v915 = vunpack.c.l.b16 %v190
    %v916 = vunpack.c.h.b16 %v190
    %v917 = vunpack.c.l.b16 %v191
    %v918 = vunpack.c.h.b16 %v191
    %v919 = vunpack.c.l.b16 %v192
    %v920 = vunpack.c.h.b16 %v192
    %v921 = vunpack.c.l.b16 %v193
    %v922 = vunpack.c.h.b16 %v193
    %v923 = vunpack.c.l.b16 %v194
    %v924 = vunpack.c.h.b16 %v194
    %v925 = vunpack.c.l.b16 %v195
    %v926 = vunpack.c.h.b16 %v195
    %v927 = vunpack.c.l.b16 %v196
    %v928 = vunpack.c.h.b16 %v196
    %v929 = vunpack.c.l.b16 %v197
    %v930 = vunpack.c.h.b16 %v197
    %v931 = vunpack.c.l.b16 %v198
    %v932 = vunpack.c.h.b16 %v198
    %v933 = vunpack.c.l.b16 %v199
    %v934 = vunpack.c.h.b16 %v199
    %v935 = vunpack.c.l.b16 %v200
    %v936 = vunpack.c.h.b16 %v200
    %v937 = vunpack.c.l.b16 %v201
    %v938 = vunpack.c.h.b16 %v201
    %v939 = vunpack.c.l.b16 %v202
    %v940 = vunpack.c.h.b16 %v202
    %v941 = vunpack.c.l.b16 %v203
    %v942 = vunpack.c.h.b16 %v203
    %v943 = vunpack.c.l.b16 %v204
    %v944 = vunpack.c.h.b16 %v204
    %v945 = vunpack.c.l.b16 %v205
    %v946 = vunpack.c.h.b16 %v205
    %v947 = vunpack.c.l.b16 %v206
    %v948 = vunpack.c.h.b16 %v206
    %v949 = vunpack.c.l.b16 %v207
    %v950 = vunpack.c.h.b16 %v207
    %v951 = vunpack.c.l.b16 %v208
    %v952 = vunpack.c.h.b16 %v208
    %v953 = vunpack.c.l.b16 %v209
    %v954 = vunpack.c.h.b16 %v209
    %v955 = vunpack.c.l.b16 %v210
    %v956 = vunpack.c.h.b16 %v210
    %v957 = vunpack.c.l.b16 %v211
    %v958 = vunpack.c.h.b16 %v211
    %v959 = vunpack.c.l.b16 %v212
    %v960 = vunpack.c.h.b16 %v212
    %v961 = vunpack.c.l.b16 %v213
    %v962 = vunpack.c.h.b16 %v213
    %v963 = vunpack.c.l.b16 %v214
    %v964 = vunpack.c.h.b16 %v214
    %v965 = vunpack.c.l.b16 %v215
    %v966 = vunpack.c.h.b16 %v215
    %v967 = vunpack.c.l.b16 %v216
    %v968 = vunpack.c.h.b16 %v216
    %v969 = vunpack.c.l.b16 %v217
    %v970 = vunpack.c.h.b16 %v217
    %v971 = vunpack.c.l.b16 %v218
    %v972 = vunpack.c.h.b16 %v218
    %v973 = vunpack.c.l.b16 %v219
    %v974 = vunpack.c.h.b16 %v219
    %v975 = vunpack.c.l.b16 %v220
    %v976 = vunpack.c.h.b16 %v220
    %v977 = vunpack.c.l.b16 %v221
    %v978 = vunpack.c.h.b16 %v221
    %v979 = vunpack.c.l.b16 %v222
    %v980 = vunpack.c.h.b16 %v222
    %v981 = vunpack.c.l.b16 %v223
    %v982 = vunpack.c.h.b16 %v223
    %v983 = vunpack.c.l.b16 %v224
    %v984 = vunpack.c.h.b16 %v224
    %v985 = vunpack.c.l.b16 %v225
    %v986 = vunpack.c.h.b16 %v225
    %v987 = vunpack.c.l.b16 %v226
    %v988 = vunpack.c.h.b16 %v226
    %v989 = vunpack.c.l.b16 %v227
    %v990 = vunpack.c.h.b16 %v227
    %v991 = vunpack.c.l.b16 %v228
    %v992 = vunpack.c.h.b16 %v228
    %v993 = vunpack.c.l.b16 %v229
    %v994 = vunpack.c.h.b16 %v229
    %v995 = vunpack.c.l.b16 %v230
    %v996 = vunpack.c.h.b16 %v230
    %v997 = vunpack.c.l.b16 %v231
    %v998 = vunpack.c.h.b16 %v231
    %v999 = vunpack.c.l.b16 %v232
    %v1000 = vunpack.c.h.b16 %v232
    %v1001 = vunpack.c.l.b16 %v233
    %v1002 = vunpack.c.h.b16 %v233
    %v1003 = vunpack.c.l.b16 %v234
    %v1004 = vunpack.c.h.b16 %v234
    %v1005 = vunpack.c.l.b16 %v235
    %v1006 = vunpack.c.h.b16 %v235
    %v1007 = vunpack.c.l.b16 %v236
    %v1008 = vunpack.c.h.b16 %v236
    %v1009 = vunpack.c.l.b16 %v237
    %v1010 = vunpack.c.h.b16 %v237
    %v1011 = vunpack.c.l.b16 %v238
    %v1012 = vunpack.c.h.b16 %v238
    %v1013 = vunpack.c.l.b16 %v239
    %v1014 = vunpack.c.h.b16 %v239
    %v1015 = vunpack.c.l.b16 %v240
    %v1016 = vunpack.c.h.b16 %v240
    %v1017 = vunpack.c.l.b16 %v241
    %v1018 = vunpack.c.h.b16 %v241
    %v1019 = vunpack.c.l.b16 %v242
    %v1020 = vunpack.c.h.b16 %v242
    %v1021 = vunpack.c.l.b16 %v243
    %v1022 = vunpack.c.h.b16 %v243
    %v1023 = vunpack.c.l.b16 %v244
    %v1024 = vunpack.c.h.b16 %v244
    %v1025 = vunpack.c.l.b16 %v245
    %v1026 = vunpack.c.h.b16 %v245
    %v1027 = vunpack.c.l.b16 %v246
    %v1028 = vunpack.c.h.b16 %v246
    %v1029 = vunpack.c.l.b16 %v247
    %v1030 = vunpack.c.h.b16 %v247
    %v1031 = vunpack.c.l.b16 %v248
    %v1032 = vunpack.c.h.b16 %v248
    %v1033 = vunpack.c.l.b16 %v249
    %v1034 = vunpack.c.h.b16 %v249
    %v1035 = vunpack.c.l.b16 %v250
    %v1036 = vunpack.c.h.b16 %v250
    %v1037 = vunpack.c.l.b16 %v251
    %v1038 = vunpack.c.h.b16 %v251
    %v1039 = vunpack.c.l.b16 %v252
    %v1040 = vunpack.c.h.b16 %v252
    %v1041 = vunpack.c.l.b16 %v253
    %v1042 = vunpack.c.h.b16 %v253
    %v1043 = vunpack.c.l.b16 %v254
    %v1044 = vunpack.c.h.b16 %v254
    %v1045 = vunpack.c.l.b16 %v255
    %v1046 = vunpack.c.h.b16 %v255
    %v1047 = vunpack.c.l.b16 %v256
    %v1048 = vunpack.c.h.b16 %v256
    %v1049 = vunpack.c.l.b16 %v257
    %v1050 = vunpack.c.h.b16 %v257
    %v1051 = vunpack.c.l.b16 %v258
    %v1052 = vunpack.c.h.b16 %v258
    %v1053 = vunpack.c.l.b16 %v259
    %v1054 = vunpack.c.h.b16 %v259
    %v1055 = vunpack.c.l.b16 %v260
    %v1056 = vunpack.c.h.b16 %v260
    %v1057 = vunpack.c.l.b16 %v261
    %v1058 = vunpack.c.h.b16 %v261
    %v1059 = vunpack.c.l.b16 %v262
    %v1060 = vunpack.c.h.b16 %v262
    %v1061 = vunpack.c.l.b16 %v263
    %v1062 = vunpack.c.h.b16 %v263
    %v1063 = vunpack.c.l.b16 %v264
    %v1064 = vunpack.c.h.b16 %v264
    %v1065 = vunpack.c.l.b16 %v265
    %v1066 = vunpack.c.h.b16 %v265
    %v1067 = vunpack.c.l.b16 %v266
    %v1068 = vunpack.c.h.b16 %v266
    %v1069 = vunpack.c.l.b16 %v267
    %v1070 = vunpack.c.h.b16 %v267
    %v1071 = vunpack.c.l.b16 %v268
    %v1072 = vunpack.c.h.b16 %v268
    %v1073 = vunpack.c.l.b16 %v269
    %v1074 = vunpack.c.h.b16 %v269
    %v1075 = vunpack.c.l.b16 %v270
    %v1076 = vunpack.c.h.b16 %v270
    %v1077 = vunpack.c.l.b16 %v271
    %v1078 = vunpack.c.h.b16 %v271
    %v1079 = vunpack.c.l.b16 %v272
    %v1080 = vunpack.c.h.b16 %v272
    %v1081 = vunpack.c.l.b16 %v273
    %v1082 = vunpack.c.h.b16 %v273
    %v1083 = vunpack.c.l.b16 %v274
    %v1084 = vunpack.c.h.b16 %v274
    %v1085 = vunpack.c.l.b16 %v275
    %v1086 = vunpack.c.h.b16 %v275
    %v1087 = vunpack.c.l.b16 %v276
    %v1088 = vunpack.c.h.b16 %v276
    %v1089 = vunpack.c.l.b16 %v277
    %v1090 = vunpack.c.h.b16 %v277
    %v1091 = vunpack.c.l.b16 %v278
    %v1092 = vunpack.c.h.b16 %v278
    %v1093 = vunpack.c.l.b16 %v279
    %v1094 = vunpack.c.h.b16 %v279
    %v1095 = vunpack.c.l.b16 %v280
    %v1096 = vunpack.c.h.b16 %v280
    %v1097 = vunpack.c.l.b16 %v281
    %v1098 = vunpack.c.h.b16 %v281
    %v1099 = vunpack.c.l.b16 %v282
    %v1100 = vunpack.c.h.b16 %v282
    %v1101 = vunpack.c.l.b16 %v283
    %v1102 = vunpack.c.h.b16 %v283
    %v1103 = vunpack.c.l.b16 %v284
    %v1104 = vunpack.c.h.b16 %v284
    %v1105 = vunpack.c.l.b16 %v285
    %v1106 = vunpack.c.h.b16 %v285
    %v1107 = vunpack.c.l.b16 %v286
    %v1108 = vunpack.c.h.b16 %v286
    %v1109 = vunpack.c.l.b16 %v287
    %v1110 = vunpack.c.h.b16 %v287
    %v1111 = vunpack.c.l.b16 %v288
    %v1112 = vunpack.c.h.b16 %v288
    %v1113 = vunpack.c.l.b16 %v289
    %v1114 = vunpack.c.h.b16 %v289
    %v1115 = vunpack.c.l.b16 %v290
    %v1116 = vunpack.c.h.b16 %v290
    %v1117 = vunpack.c.l.b16 %v291
    %v1118 = vunpack.c.h.b16 %v291
    %v1119 = vunpack.c.l.b16 %v292
    %v1120 = vunpack.c.h.b16 %v292
    %v1121 = vunpack.c.l.b16 %v293
    %v1122 = vunpack.c.h.b16 %v293
    %v1123 = vunpack.c.l.b16 %v294
    %v1124 = vunpack.c.h.b16 %v294
    %v1125 = vpack.c.b16 %v621, %v613
    %v1126 = vpack.c.b16 %v622, %v614
    %v1127 = vpack.c.b16 %v623, %v615
    %v1128 = vpack.c.b16 %v624, %v616
    %v1129 = vpack.c.b16 %v625, %v617
    %v1130 = vpack.c.b16 %v626, %v618
    %v1131 = vpack.c.b16 %v627, %v619
    %v1132 = vpack.c.b16 %v628, %v620
    %v1133 = vpack.c.b16 %v637, %v629
    %v1134 = vpack.c.b16 %v638, %v630
    %v1135 = vpack.c.b16 %v639, %v631
    %v1136 = vpack.c.b16 %v640, %v632
    %v1137 = vpack.c.b16 %v641, %v633
    %v1138 = vpack.c.b16 %v642, %v634
    %v1139 = vpack.c.b16 %v643, %v635
    %v1140 = vpack.c.b16 %v644, %v636
    %v1141 = vpack.c.b16 %v653, %v645
    %v1142 = vpack.c.b16 %v654, %v646
    %v1143 = vpack.c.b16 %v655, %v647
    %v1144 = vpack.c.b16 %v656, %v648
    %v1145 = vpack.c.b16 %v657, %v649
    %v1146 = vpack.c.b16 %v658, %v650
    %v1147 = vpack.c.b16 %v659, %v651
    %v1148 = vpack.c.b16 %v660, %v652
    %v1149 = vpack.c.b16 %v669, %v661
    %v1150 = vpack.c.b16 %v670, %v662
    %v1151 = vpack.c.b16 %v671, %v663
    %v1152 = vpack.c.b16 %v672, %v664
    %v1153 = vpack.c.b16 %v673, %v665
    %v1154 = vpack.c.b16 %v674, %v666
    %v1155 = vpack.c.b16 %v675, %v667
    %v1156 = vpack.c.b16 %v676, %v668
    %v1157 = vpack.c.b16 %v685, %v677
    %v1158 = vpack.c.b16 %v686, %v678
    %v1159 = vpack.c.b16 %v687, %v679
    %v1160 = vpack.c.b16 %v688, %v680
    %v1161 = vpack.c.b16 %v689, %v681
    %v1162 = vpack.c.b16 %v690, %v682
    %v1163 = vpack.c.b16 %v691, %v683
    %v1164 = vpack.c.b16 %v692, %v684
    %v1165 = vpack.c.b16 %v701, %v693
    %v1166 = vpack.c.b16 %v702, %v694
    %v1167 = vpack.c.b16 %v703, %v695
    %v1168 = vpack.c.b16 %v704, %v696
    %v1169 = vpack.c.b16 %v705, %v697
    %v1170 = vpack.c.b16 %v706, %v698
    %v1171 = vpack.c.b16 %v707, %v699
    %v1172 = vpack.c.b16 %v708, %v700
    %v1173 = vpack.c.b16 %v717, %v709
    %v1174 = vpack.c.b16 %v718, %v710
    %v1175 = vpack.c.b16 %v719, %v711
    %v1176 = vpack.c.b16 %v720, %v712
    %v1177 = vpack.c.b16 %v721, %v713
    %v1178 = vpack.c.b16 %v722, %v714
    %v1179 = vpack.c.b16 %v723, %v715
    %v1180 = vpack.c.b16 %v724, %v716
    %v1181 = vpack.c.b16 %v733, %v725
    %v1182 = vpack.c.b16 %v734, %v726
    %v1183 = vpack.c.b16 %v735, %v727
    %v1184 = vpack.c.b16 %v736, %v728
    %v1185 = vpack.c.b16 %v737, %v729
    %v1186 = vpack.c.b16 %v738, %v730
    %v1187 = vpack.c.b16 %v739, %v731
    %v1188 = vpack.c.b16 %v740, %v732
    %v1189 = vpack.c.b16 %v749, %v741
    %v1190 = vpack.c.b16 %v750, %v742
    %v1191 = vpack.c.b16 %v751, %v743
    %v1192 = vpack.c.b16 %v752, %v744
    %v1193 = vpack.c.b16 %v753, %v745
    %v1194 = vpack.c.b16 %v754, %v746
    %v1195 = vpack.c.b16 %v755, %v747
    %v1196 = vpack.c.b16 %v756, %v748
    %v1197 = vpack.c.b16 %v765, %v757
    %v1198 = vpack.c.b16 %v766, %v758
    %v1199 = vpack.c.b16 %v767, %v759
    %v1200 = vpack.c.b16 %v768, %v760
    %v1201 = vpack.c.b16 %v769, %v761
    %v1202 = vpack.c.b16 %v770, %v762
    %v1203 = vpack.c.b16 %v771, %v763
    %v1204 = vpack.c.b16 %v772, %v764
    %v1205 = vpack.c.b16 %v781, %v773
    %v1206 = vpack.c.b16 %v782, %v774
    %v1207 = vpack.c.b16 %v783, %v775
    %v1208 = vpack.c.b16 %v784, %v776
    %v1209 = vpack.c.b16 %v785, %v777
    %v1210 = vpack.c.b16 %v786, %v778
    %v1211 = vpack.c.b16 %v787, %v779
    %v1212 = vpack.c.b16 %v788, %v780
    %v1213 = vpack.c.b16 %v797, %v789
    %v1214 = vpack.c.b16 %v798, %v790
    %v1215 = vpack.c.b16 %v799, %v791
    %v1216 = vpack.c.b16 %v800, %v792
    %v1217 = vpack.c.b16 %v801, %v793
    %v1218 = vpack.c.b16 %v802, %v794
    %v1219 = vpack.c.b16 %v803, %v795
    %v1220 = vpack.c.b16 %v804, %v796
    %v1221 = vpack.c.b16 %v813, %v805
    %v1222 = vpack.c.b16 %v814, %v806
    %v1223 = vpack.c.b16 %v815, %v807
    %v1224 = vpack.c.b16 %v816, %v808
    %v1225 = vpack.c.b16 %v817, %v809
    %v1226 = vpack.c.b16 %v818, %v810
    %v1227 = vpack.c.b16 %v819, %v811
    %v1228 = vpack.c.b16 %v820, %v812
    %v1229 = vpack.c.b16 %v829, %v821
    %v1230 = vpack.c.b16 %v830, %v822
    %v1231 = vpack.c.b16 %v831, %v823
    %v1232 = vpack.c.b16 %v832, %v824
    %v1233 = vpack.c.b16 %v833, %v825
    %v1234 = vpack.c.b16 %v834, %v826
    %v1235 = vpack.c.b16 %v835, %v827
    %v1236 = vpack.c.b16 %v836, %v828
    %v1237 = vpack.c.b16 %v845, %v837
    %v1238 = vpack.c.b16 %v846, %v838
    %v1239 = vpack.c.b16 %v847, %v839
    %v1240 = vpack.c.b16 %v848, %v840
    %v1241 = vpack.c.b16 %v849, %v841
    %v1242 = vpack.c.b16 %v850, %v842
    %v1243 = vpack.c.b16 %v851, %v843
    %v1244 = vpack.c.b16 %v852, %v844
    %v1245 = vpack.c.b16 %v861, %v853
    %v1246 = vpack.c.b16 %v862, %v854
    %v1247 = vpack.c.b16 %v863, %v855
    %v1248 = vpack.c.b16 %v864, %v856
    %v1249 = vpack.c.b16 %v865, %v857
    %v1250 = vpack.c.b16 %v866, %v858
    %v1251 = vpack.c.b16 %v867, %v859
    %v1252 = vpack.c.b16 %v868, %v860
    %v1253 = vpack.c.b16 %v877, %v869
    %v1254 = vpack.c.b16 %v878, %v870
    %v1255 = vpack.c.b16 %v879, %v871
    %v1256 = vpack.c.b16 %v880, %v872
    %v1257 = vpack.c.b16 %v881, %v873
    %v1258 = vpack.c.b16 %v882, %v874
    %v1259 = vpack.c.b16 %v883, %v875
    %v1260 = vpack.c.b16 %v884, %v876
    %v1261 = vpack.c.b16 %v893, %v885
    %v1262 = vpack.c.b16 %v894, %v886
    %v1263 = vpack.c.b16 %v895, %v887
    %v1264 = vpack.c.b16 %v896, %v888
    %v1265 = vpack.c.b16 %v897, %v889
    %v1266 = vpack.c.b16 %v898, %v890
    %v1267 = vpack.c.b16 %v899, %v891
    %v1268 = vpack.c.b16 %v900, %v892
    %v1269 = vpack.c.b16 %v909, %v901
    %v1270 = vpack.c.b16 %v910, %v902
    %v1271 = vpack.c.b16 %v911, %v903
    %v1272 = vpack.c.b16 %v912, %v904
    %v1273 = vpack.c.b16 %v913, %v905
    %v1274 = vpack.c.b16 %v914, %v906
    %v1275 = vpack.c.b16 %v915, %v907
    %v1276 = vpack.c.b16 %v916, %v908
    %v1277 = vpack.c.b16 %v925, %v917
    %v1278 = vpack.c.b16 %v926, %v918
    %v1279 = vpack.c.b16 %v927, %v919
    %v1280 = vpack.c.b16 %v928, %v920
    %v1281 = vpack.c.b16 %v929, %v921
    %v1282 = vpack.c.b16 %v930, %v922
    %v1283 = vpack.c.b16 %v931, %v923
    %v1284 = vpack.c.b16 %v932, %v924
    %v1285 = vpack.c.b16 %v941, %v933
    %v1286 = vpack.c.b16 %v942, %v934
    %v1287 = vpack.c.b16 %v943, %v935
    %v1288 = vpack.c.b16 %v944, %v936
    %v1289 = vpack.c.b16 %v945, %v937
    %v1290 = vpack.c.b16 %v946, %v938
    %v1291 = vpack.c.b16 %v947, %v939
    %v1292 = vpack.c.b16 %v948, %v940
    %v1293 = vpack.c.b16 %v957, %v949
    %v1294 = vpack.c.b16 %v958, %v950
    %v1295 = vpack.c.b16 %v959, %v951
    %v1296 = vpack.c.b16 %v960, %v952
    %v1297 = vpack.c.b16 %v961, %v953
    %v1298 = vpack.c.b16 %v962, %v954
    %v1299 = vpack.c.b16 %v963, %v955
    %v1300 = vpack.c.b16 %v964, %v956
    %v1301 = vpack.c.b16 %v973, %v965
    %v1302 = vpack.c.b16 %v974, %v966
    %v1303 = vpack.c.b16 %v975, %v967
    %v1304 = vpack.c.b16 %v976, %v968
    %v1305 = vpack.c.b16 %v977, %v969
    %v1306 = vpack.c.b16 %v978, %v970
    %v1307 = vpack.c.b16 %v979, %v971
    %v1308 = vpack.c.b16 %v980, %v972
    %v1309 = vpack.c.b16 %v989, %v981
    %v1310 = vpack.c.b16 %v990, %v982
    %v1311 = vpack.c.b16 %v991, %v983
    %v1312 = vpack.c.b16 %v992, %v984
    %v1313 = vpack.c.b16 %v993, %v985
    %v1314 = vpack.c.b16 %v994, %v986
    %v1315 = vpack.c.b16 %v995, %v987
    %v1316 = vpack.c.b16 %v996, %v988
    %v1317 = vpack.c.b16 %v1005, %v997
    %v1318 = vpack.c.b16 %v1006, %v998
    %v1319 = vpack.c.b16 %v1007, %v999
    %v1320 = vpack.c.b16 %v1008, %v1000
    %v1321 = vpack.c.b16 %v1009, %v1001
    %v1322 = vpack.c.b16 %v1010, %v1002
    %v1323 = vpack.c.b16 %v1011, %v1003
    %v1324 = vpack.c.b16 %v1012, %v1004
    %v1325 = vpack.c.b16 %v1021, %v1013
    %v1326 = vpack.c.b16 %v1022, %v1014
    %v1327 = vpack.c.b16 %v1023, %v1015
    %v1328 = vpack.c.b16 %v1024, %v1016
    %v1329 = vpack.c.b16 %v1025, %v1017
    %v1330 = vpack.c.b16 %v1026, %v1018
    %v1331 = vpack.c.b16 %v1027, %v1019
    %v1332 = vpack.c.b16 %v1028, %v1020
    %v1333 = vpack.c.b16 %v1037, %v1029
    %v1334 = vpack.c.b16 %v1038, %v1030
    %v1335 = vpack.c.b16 %v1039, %v1031
    %v1336 = vpack.c.b16 %v1040, %v1032
    %v1337 = vpack.c.b16 %v1041, %v1033
    %v1338 = vpack.c.b16 %v1042, %v1034
    %v1339 = vpack.c.b16 %v1043, %v1035
    %v1340 = vpack.c.b16 %v1044, %v1036
    %v1341 = vpack.c.b16 %v1053, %v1045
    %v1342 = vpack.c.b16 %v1054, %v1046
    %v1343 = vpack.c.b16 %v1055, %v1047
    %v1344 = vpack.c.b16 %v1056, %v1048
    %v1345 = vpack.c.b16 %v1057, %v1049
    %v1346 = vpack.c.b16 %v1058, %v1050
    %v1347 = vpack.c.b16 %v1059, %v1051
    %v1348 = vpack.c.b16 %v1060, %v1052
    %v1349 = vpack.c.b16 %v1069, %v1061
    %v1350 = vpack.c.b16 %v1070, %v1062
    %v1351 = vpack.c.b16 %v1071, %v1063
    %v1352 = vpack.c.b16 %v1072, %v1064
    %v1353 = vpack.c.b16 %v1073, %v1065
    %v1354 = vpack.c.b16 %v1074, %v1066
    %v1355 = vpack.c.b16 %v1075, %v1067
    %v1356 = vpack.c.b16 %v1076, %v1068
    %v1357 = vpack.c.b16 %v1085, %v1077
    %v1358 = vpack.c.b16 %v1086, %v1078
    %v1359 = vpack.c.b16 %v1087, %v1079
    %v1360 = vpack.c.b16 %v1088, %v1080
    %v1361 = vpack.c.b16 %v1089, %v1081
    %v1362 = vpack.c.b16 %v1090, %v1082
    %v1363 = vpack.c.b16 %v1091, %v1083
    %v1364 = vpack.c.b16 %v1092, %v1084
    %v1365 = vpack.c.b16 %v1101, %v1093
    %v1366 = vpack.c.b16 %v1102, %v1094
    %v1367 = vpack.c.b16 %v1103, %v1095
    %v1368 = vpack.c.b16 %v1104, %v1096
    %v1369 = vpack.c.b16 %v1105, %v1097
    %v1370 = vpack.c.b16 %v1106, %v1098
    %v1371 = vpack.c.b16 %v1107, %v1099
    %v1372 = vpack.c.b16 %v1108, %v1100
    %v1373 = vpack.c.b16 %v1117, %v1109
    %v1374 = vpack.c.b16 %v1118, %v1110
    %v1375 = vpack.c.b16 %v1119, %v1111
    %v1376 = vpack.c.b16 %v1120, %v1112
    %v1377 = vpack.c.b16 %v1121, %v1113
    %v1378 = vpack.c.b16 %v1122, %v1114
    %v1379 = vpack.c.b16 %v1123, %v1115
    %v1380 = vpack.c.b16 %v1124, %v1116
    %1637 = vmatprep.subr.bf16.mxu0 %v1182
    %1638 = vmatpush1.bf16.msra.mxu0 %v1181
    %1639 = vmatprep.subr.bf16.mxu0 %v1174
    %1640 = vmatpush1.bf16.msra.mxu0 %v1173
    %1641 = vmatprep.subr.bf16.mxu0 %v1166
    %1642 = vmatpush1.bf16.msra.mxu0 %v1165
    %1643 = vmatprep.subr.bf16.mxu0 %v1158
    %1644 = vmatpush1.bf16.msra.mxu0 %v1157
    %1645 = vmatprep.subr.bf16.mxu0 %v1150
    %1646 = vmatpush1.bf16.msra.mxu0 %v1149
    %1647 = vmatprep.subr.bf16.mxu0 %v1142
    %1648 = vmatpush1.bf16.msra.mxu0 %v1141
    %1649 = vmatprep.subr.bf16.mxu0 %v1134
    %1650 = vmatpush1.bf16.msra.mxu0 %v1133
    %1651 = vmatprep.subr.bf16.mxu0 %v1126
    %1652 = vmatpush1.bf16.msra.mxu0 %v1125
    %1653 = vmatprep.subr.bf16.mxu0 %v1246
    %1654 = vmatpush2.bf16.msra.mxu0 %v1245
    %1655 = vmatprep.subr.bf16.mxu0 %v1238
    %1656 = vmatpush2.bf16.msra.mxu0 %v1237
    %1657 = vmatprep.subr.bf16.mxu0 %v1230
    %1658 = vmatpush2.bf16.msra.mxu0 %v1229
    %1659 = vmatprep.subr.bf16.mxu0 %v1222
    %1660 = vmatpush2.bf16.msra.mxu0 %v1221
    %1661 = vmatprep.subr.bf16.mxu0 %v1214
    %1662 = vmatpush2.bf16.msra.mxu0 %v1213
    %1663 = vmatprep.subr.bf16.mxu0 %v1206
    %1664 = vmatpush2.bf16.msra.mxu0 %v1205
    %1665 = vmatprep.subr.bf16.mxu0 %v1198
    %1666 = vmatpush2.bf16.msra.mxu0 %v1197
    %1667 = vmatprep.subr.bf16.mxu0 %v1190
    %1668 = vmatpush2.bf16.msra.mxu0 %v1189
    %1669 = vmatprep.mubr.bf16.mxu0 %v350
    %1670 = vmatmul.mubr.bf16.gmra.mxu0 %v349
    %v1671 = vpop.f32.mrf.mxu0
    %v1672 = vadd.f32 %v300, %v1671
    %v1673 = vpop.f32.mrf.mxu0
    %v1674 = vadd.f32 %v304, %v1673
    %v1675 = vpop.f32.mrf.mxu0
    %v1676 = vadd.f32 %v300, %v1675
    %v1677 = vpop.f32.mrf.mxu0
    %v1678 = vadd.f32 %v304, %v1677
    %1679 = vdwg.mxu0
    %1680 = vmatprep.subr.bf16.mxu0 %v1310
    %1681 = vmatpush1.bf16.msra.mxu0 %v1309
    %1682 = vmatprep.subr.bf16.mxu0 %v1302
    %1683 = vmatpush1.bf16.msra.mxu0 %v1301
    %1684 = vmatprep.subr.bf16.mxu0 %v1294
    %1685 = vmatpush1.bf16.msra.mxu0 %v1293
    %1686 = vmatprep.subr.bf16.mxu0 %v1286
    %1687 = vmatpush1.bf16.msra.mxu0 %v1285
    %1688 = vmatprep.subr.bf16.mxu0 %v1278
    %1689 = vmatpush1.bf16.msra.mxu0 %v1277
    %1690 = vmatprep.subr.bf16.mxu0 %v1270
    %1691 = vmatpush1.bf16.msra.mxu0 %v1269
    %1692 = vmatprep.subr.bf16.mxu0 %v1262
    %1693 = vmatpush1.bf16.msra.mxu0 %v1261
    %1694 = vmatprep.subr.bf16.mxu0 %v1254
    %1695 = vmatpush1.bf16.msra.mxu0 %v1253
    %1696 = vmatprep.subr.bf16.mxu0 %v1374
    %1697 = vmatpush2.bf16.msra.mxu0 %v1373
    %1698 = vmatprep.subr.bf16.mxu0 %v1366
    %1699 = vmatpush2.bf16.msra.mxu0 %v1365
    %1700 = vmatprep.subr.bf16.mxu0 %v1358
    %1701 = vmatpush2.bf16.msra.mxu0 %v1357
    %1702 = vmatprep.subr.bf16.mxu0 %v1350
    %1703 = vmatpush2.bf16.msra.mxu0 %v1349
    %1704 = vmatprep.subr.bf16.mxu0 %v1342
    %1705 = vmatpush2.bf16.msra.mxu0 %v1341
    %1706 = vmatprep.subr.bf16.mxu0 %v1334
    %1707 = vmatpush2.bf16.msra.mxu0 %v1333
    %1708 = vmatprep.subr.bf16.mxu0 %v1326
    %1709 = vmatpush2.bf16.msra.mxu0 %v1325
    %1710 = vmatprep.subr.bf16.mxu0 %v1318
    %1711 = vmatpush2.bf16.msra.mxu0 %v1317
    %1712 = vmatprep.mubr.bf16.mxu0 %v352
    %1713 = vmatmul.mubr.bf16.gmra.mxu0 %v351
    %v1714 = vpop.f32.mrf.mxu0
    %v1715 = vadd.f32 %v1672, %v1714
    %v1716 = vpop.f32.mrf.mxu0
    %v1717 = vadd.f32 %v1674, %v1716
    %v1718 = vpop.f32.mrf.mxu0
    %v1719 = vadd.f32 %v1676, %v1718
    %v1720 = vpop.f32.mrf.mxu0
    %v1721 = vadd.f32 %v1678, %v1720
    %1722 = vdwg.mxu0
    %1723 = vmatprep.subr.bf16.mxu0 %v1184
    %1724 = vmatpush1.bf16.msra.mxu0 %v1183
    %1725 = vmatprep.subr.bf16.mxu0 %v1176
    %1726 = vmatpush1.bf16.msra.mxu0 %v1175
    %1727 = vmatprep.subr.bf16.mxu0 %v1168
    %1728 = vmatpush1.bf16.msra.mxu0 %v1167
    %1729 = vmatprep.subr.bf16.mxu0 %v1160
    %1730 = vmatpush1.bf16.msra.mxu0 %v1159
    %1731 = vmatprep.subr.bf16.mxu0 %v1152
    %1732 = vmatpush1.bf16.msra.mxu0 %v1151
    %1733 = vmatprep.subr.bf16.mxu0 %v1144
    %1734 = vmatpush1.bf16.msra.mxu0 %v1143
    %1735 = vmatprep.subr.bf16.mxu0 %v1136
    %1736 = vmatpush1.bf16.msra.mxu0 %v1135
    %1737 = vmatprep.subr.bf16.mxu0 %v1128
    %1738 = vmatpush1.bf16.msra.mxu0 %v1127
    %1739 = vmatprep.subr.bf16.mxu0 %v1248
    %1740 = vmatpush2.bf16.msra.mxu0 %v1247
    %1741 = vmatprep.subr.bf16.mxu0 %v1240
    %1742 = vmatpush2.bf16.msra.mxu0 %v1239
    %1743 = vmatprep.subr.bf16.mxu0 %v1232
    %1744 = vmatpush2.bf16.msra.mxu0 %v1231
    %1745 = vmatprep.subr.bf16.mxu0 %v1224
    %1746 = vmatpush2.bf16.msra.mxu0 %v1223
    %1747 = vmatprep.subr.bf16.mxu0 %v1216
    %1748 = vmatpush2.bf16.msra.mxu0 %v1215
    %1749 = vmatprep.subr.bf16.mxu0 %v1208
    %1750 = vmatpush2.bf16.msra.mxu0 %v1207
    %1751 = vmatprep.subr.bf16.mxu0 %v1200
    %1752 = vmatpush2.bf16.msra.mxu0 %v1199
    %1753 = vmatprep.subr.bf16.mxu0 %v1192
    %1754 = vmatpush2.bf16.msra.mxu0 %v1191
    %1755 = vmatprep.mubr.bf16.mxu0 %v350
    %1756 = vmatmul.mubr.bf16.gmra.mxu0 %v349
    %v1757 = vpop.f32.mrf.mxu0
    %v1758 = vadd.f32 %v308, %v1757
    %v1759 = vpop.f32.mrf.mxu0
    %v1760 = vadd.f32 %v312, %v1759
    %v1761 = vpop.f32.mrf.mxu0
    %v1762 = vadd.f32 %v308, %v1761
    %v1763 = vpop.f32.mrf.mxu0
    %v1764 = vadd.f32 %v312, %v1763
    %1765 = vdwg.mxu0
    %1766 = vmatprep.subr.bf16.mxu0 %v1312
    %1767 = vmatpush1.bf16.msra.mxu0 %v1311
    %1768 = vmatprep.subr.bf16.mxu0 %v1304
    %1769 = vmatpush1.bf16.msra.mxu0 %v1303
    %1770 = vmatprep.subr.bf16.mxu0 %v1296
    %1771 = vmatpush1.bf16.msra.mxu0 %v1295
    %1772 = vmatprep.subr.bf16.mxu0 %v1288
    %1773 = vmatpush1.bf16.msra.mxu0 %v1287
    %1774 = vmatprep.subr.bf16.mxu0 %v1280
    %1775 = vmatpush1.bf16.msra.mxu0 %v1279
    %1776 = vmatprep.subr.bf16.mxu0 %v1272
    %1777 = vmatpush1.bf16.msra.mxu0 %v1271
    %1778 = vmatprep.subr.bf16.mxu0 %v1264
    %1779 = vmatpush1.bf16.msra.mxu0 %v1263
    %1780 = vmatprep.subr.bf16.mxu0 %v1256
    %1781 = vmatpush1.bf16.msra.mxu0 %v1255
    %1782 = vmatprep.subr.bf16.mxu0 %v1376
    %1783 = vmatpush2.bf16.msra.mxu0 %v1375
    %1784 = vmatprep.subr.bf16.mxu0 %v1368
    %1785 = vmatpush2.bf16.msra.mxu0 %v1367
    %1786 = vmatprep.subr.bf16.mxu0 %v1360
    %1787 = vmatpush2.bf16.msra.mxu0 %v1359
    %1788 = vmatprep.subr.bf16.mxu0 %v1352
    %1789 = vmatpush2.bf16.msra.mxu0 %v1351
    %1790 = vmatprep.subr.bf16.mxu0 %v1344
    %1791 = vmatpush2.bf16.msra.mxu0 %v1343
    %1792 = vmatprep.subr.bf16.mxu0 %v1336
    %1793 = vmatpush2.bf16.msra.mxu0 %v1335
    %1794 = vmatprep.subr.bf16.mxu0 %v1328
    %1795 = vmatpush2.bf16.msra.mxu0 %v1327
    %1796 = vmatprep.subr.bf16.mxu0 %v1320
    %1797 = vmatpush2.bf16.msra.mxu0 %v1319
    %1798 = vmatprep.mubr.bf16.mxu0 %v352
    %1799 = vmatmul.mubr.bf16.gmra.mxu0 %v351
    %v1800 = vpop.f32.mrf.mxu0
    %v1801 = vadd.f32 %v1758, %v1800
    %v1802 = vpop.f32.mrf.mxu0
    %v1803 = vadd.f32 %v1760, %v1802
    %v1804 = vpop.f32.mrf.mxu0
    %v1805 = vadd.f32 %v1762, %v1804
    %v1806 = vpop.f32.mrf.mxu0
    %v1807 = vadd.f32 %v1764, %v1806
    %1808 = vdwg.mxu0
    %1809 = vmatprep.subr.bf16.mxu0 %v1186
    %1810 = vmatpush1.bf16.msra.mxu0 %v1185
    %1811 = vmatprep.subr.bf16.mxu0 %v1178
    %1812 = vmatpush1.bf16.msra.mxu0 %v1177
    %1813 = vmatprep.subr.bf16.mxu0 %v1170
    %1814 = vmatpush1.bf16.msra.mxu0 %v1169
    %1815 = vmatprep.subr.bf16.mxu0 %v1162
    %1816 = vmatpush1.bf16.msra.mxu0 %v1161
    %1817 = vmatprep.subr.bf16.mxu0 %v1154
    %1818 = vmatpush1.bf16.msra.mxu0 %v1153
    %1819 = vmatprep.subr.bf16.mxu0 %v1146
    %1820 = vmatpush1.bf16.msra.mxu0 %v1145
    %1821 = vmatprep.subr.bf16.mxu0 %v1138
    %1822 = vmatpush1.bf16.msra.mxu0 %v1137
    %1823 = vmatprep.subr.bf16.mxu0 %v1130
    %1824 = vmatpush1.bf16.msra.mxu0 %v1129
    %1825 = vmatprep.subr.bf16.mxu0 %v1250
    %1826 = vmatpush2.bf16.msra.mxu0 %v1249
    %1827 = vmatprep.subr.bf16.mxu0 %v1242
    %1828 = vmatpush2.bf16.msra.mxu0 %v1241
    %1829 = vmatprep.subr.bf16.mxu0 %v1234
    %1830 = vmatpush2.bf16.msra.mxu0 %v1233
    %1831 = vmatprep.subr.bf16.mxu0 %v1226
    %1832 = vmatpush2.bf16.msra.mxu0 %v1225
    %1833 = vmatprep.subr.bf16.mxu0 %v1218
    %1834 = vmatpush2.bf16.msra.mxu0 %v1217
    %1835 = vmatprep.subr.bf16.mxu0 %v1210
    %1836 = vmatpush2.bf16.msra.mxu0 %v1209
    %1837 = vmatprep.subr.bf16.mxu0 %v1202
    %1838 = vmatpush2.bf16.msra.mxu0 %v1201
    %1839 = vmatprep.subr.bf16.mxu0 %v1194
    %1840 = vmatpush2.bf16.msra.mxu0 %v1193
    %1841 = vmatprep.mubr.bf16.mxu0 %v350
    %1842 = vmatmul.mubr.bf16.gmra.mxu0 %v349
    %v1843 = vpop.f32.mrf.mxu0
    %v1844 = vadd.f32 %v316, %v1843
    %v1845 = vpop.f32.mrf.mxu0
    %v1846 = vadd.f32 %v320, %v1845
    %v1847 = vpop.f32.mrf.mxu0
    %v1848 = vadd.f32 %v316, %v1847
    %v1849 = vpop.f32.mrf.mxu0
    %v1850 = vadd.f32 %v320, %v1849
    %1851 = vdwg.mxu0
    %1852 = vmatprep.subr.bf16.mxu0 %v1314
    %1853 = vmatpush1.bf16.msra.mxu0 %v1313
    %1854 = vmatprep.subr.bf16.mxu0 %v1306
    %1855 = vmatpush1.bf16.msra.mxu0 %v1305
    %1856 = vmatprep.subr.bf16.mxu0 %v1298
    %1857 = vmatpush1.bf16.msra.mxu0 %v1297
    %1858 = vmatprep.subr.bf16.mxu0 %v1290
    %1859 = vmatpush1.bf16.msra.mxu0 %v1289
    %1860 = vmatprep.subr.bf16.mxu0 %v1282
    %1861 = vmatpush1.bf16.msra.mxu0 %v1281
    %1862 = vmatprep.subr.bf16.mxu0 %v1274
    %1863 = vmatpush1.bf16.msra.mxu0 %v1273
    %1864 = vmatprep.subr.bf16.mxu0 %v1266
    %1865 = vmatpush1.bf16.msra.mxu0 %v1265
    %1866 = vmatprep.subr.bf16.mxu0 %v1258
    %1867 = vmatpush1.bf16.msra.mxu0 %v1257
    %1868 = vmatprep.subr.bf16.mxu0 %v1378
    %1869 = vmatpush2.bf16.msra.mxu0 %v1377
    %1870 = vmatprep.subr.bf16.mxu0 %v1370
    %1871 = vmatpush2.bf16.msra.mxu0 %v1369
    %1872 = vmatprep.subr.bf16.mxu0 %v1362
    %1873 = vmatpush2.bf16.msra.mxu0 %v1361
    %1874 = vmatprep.subr.bf16.mxu0 %v1354
    %1875 = vmatpush2.bf16.msra.mxu0 %v1353
    %1876 = vmatprep.subr.bf16.mxu0 %v1346
    %1877 = vmatpush2.bf16.msra.mxu0 %v1345
    %1878 = vmatprep.subr.bf16.mxu0 %v1338
    %1879 = vmatpush2.bf16.msra.mxu0 %v1337
    %1880 = vmatprep.subr.bf16.mxu0 %v1330
    %1881 = vmatpush2.bf16.msra.mxu0 %v1329
    %1882 = vmatprep.subr.bf16.mxu0 %v1322
    %1883 = vmatpush2.bf16.msra.mxu0 %v1321
    %1884 = vmatprep.mubr.bf16.mxu0 %v352
    %1885 = vmatmul.mubr.bf16.gmra.mxu0 %v351
    %v1886 = vpop.f32.mrf.mxu0
    %v1887 = vadd.f32 %v1844, %v1886
    %v1888 = vpop.f32.mrf.mxu0
    %v1889 = vadd.f32 %v1846, %v1888
    %v1890 = vpop.f32.mrf.mxu0
    %v1891 = vadd.f32 %v1848, %v1890
    %v1892 = vpop.f32.mrf.mxu0
    %v1893 = vadd.f32 %v1850, %v1892
    %1894 = vdwg.mxu0
    %1895 = vmatprep.subr.bf16.mxu0 %v1188
    %1896 = vmatpush1.bf16.msra.mxu0 %v1187
    %1897 = vmatprep.subr.bf16.mxu0 %v1180
    %1898 = vmatpush1.bf16.msra.mxu0 %v1179
    %1899 = vmatprep.subr.bf16.mxu0 %v1172
    %1900 = vmatpush1.bf16.msra.mxu0 %v1171
    %1901 = vmatprep.subr.bf16.mxu0 %v1164
    %1902 = vmatpush1.bf16.msra.mxu0 %v1163
    %1903 = vmatprep.subr.bf16.mxu0 %v1156
    %1904 = vmatpush1.bf16.msra.mxu0 %v1155
    %1905 = vmatprep.subr.bf16.mxu0 %v1148
    %1906 = vmatpush1.bf16.msra.mxu0 %v1147
    %1907 = vmatprep.subr.bf16.mxu0 %v1140
    %1908 = vmatpush1.bf16.msra.mxu0 %v1139
    %1909 = vmatprep.subr.bf16.mxu0 %v1132
    %1910 = vmatpush1.bf16.msra.mxu0 %v1131
    %1911 = vmatprep.subr.bf16.mxu0 %v1252
    %1912 = vmatpush2.bf16.msra.mxu0 %v1251
    %1913 = vmatprep.subr.bf16.mxu0 %v1244
    %1914 = vmatpush2.bf16.msra.mxu0 %v1243
    %1915 = vmatprep.subr.bf16.mxu0 %v1236
    %1916 = vmatpush2.bf16.msra.mxu0 %v1235
    %1917 = vmatprep.subr.bf16.mxu0 %v1228
    %1918 = vmatpush2.bf16.msra.mxu0 %v1227
    %1919 = vmatprep.subr.bf16.mxu0 %v1220
    %1920 = vmatpush2.bf16.msra.mxu0 %v1219
    %1921 = vmatprep.subr.bf16.mxu0 %v1212
    %1922 = vmatpush2.bf16.msra.mxu0 %v1211
    %1923 = vmatprep.subr.bf16.mxu0 %v1204
    %1924 = vmatpush2.bf16.msra.mxu0 %v1203
    %1925 = vmatprep.subr.bf16.mxu0 %v1196
    %1926 = vmatpush2.bf16.msra.mxu0 %v1195
    %1927 = vmatprep.mubr.bf16.mxu0 %v350
    %1928 = vmatmul.mubr.bf16.gmra.mxu0 %v349
    %v1929 = vpop.f32.mrf.mxu0
    %v1930 = vadd.f32 %v324, %v1929
    %v1931 = vpop.f32.mrf.mxu0
    %v1932 = vadd.f32 %v328, %v1931
    %v1933 = vpop.f32.mrf.mxu0
    %v1934 = vadd.f32 %v324, %v1933
    %v1935 = vpop.f32.mrf.mxu0
    %v1936 = vadd.f32 %v328, %v1935
    %1937 = vdwg.mxu0
    %1938 = vmatprep.subr.bf16.mxu0 %v1316
    %1939 = vmatpush1.bf16.msra.mxu0 %v1315
    %1940 = vmatprep.subr.bf16.mxu0 %v1308
    %1941 = vmatpush1.bf16.msra.mxu0 %v1307
    %1942 = vmatprep.subr.bf16.mxu0 %v1300
    %1943 = vmatpush1.bf16.msra.mxu0 %v1299
    %1944 = vmatprep.subr.bf16.mxu0 %v1292
    %1945 = vmatpush1.bf16.msra.mxu0 %v1291
    %1946 = vmatprep.subr.bf16.mxu0 %v1284
    %1947 = vmatpush1.bf16.msra.mxu0 %v1283
    %1948 = vmatprep.subr.bf16.mxu0 %v1276
    %1949 = vmatpush1.bf16.msra.mxu0 %v1275
    %1950 = vmatprep.subr.bf16.mxu0 %v1268
    %1951 = vmatpush1.bf16.msra.mxu0 %v1267
    %1952 = vmatprep.subr.bf16.mxu0 %v1260
    %1953 = vmatpush1.bf16.msra.mxu0 %v1259
    %1954 = vmatprep.subr.bf16.mxu0 %v1380
    %1955 = vmatpush2.bf16.msra.mxu0 %v1379
    %1956 = vmatprep.subr.bf16.mxu0 %v1372
    %1957 = vmatpush2.bf16.msra.mxu0 %v1371
    %1958 = vmatprep.subr.bf16.mxu0 %v1364
    %1959 = vmatpush2.bf16.msra.mxu0 %v1363
    %1960 = vmatprep.subr.bf16.mxu0 %v1356
    %1961 = vmatpush2.bf16.msra.mxu0 %v1355
    %1962 = vmatprep.subr.bf16.mxu0 %v1348
    %1963 = vmatpush2.bf16.msra.mxu0 %v1347
    %1964 = vmatprep.subr.bf16.mxu0 %v1340
    %1965 = vmatpush2.bf16.msra.mxu0 %v1339
    %1966 = vmatprep.subr.bf16.mxu0 %v1332
    %1967 = vmatpush2.bf16.msra.mxu0 %v1331
    %1968 = vmatprep.subr.bf16.mxu0 %v1324
    %1969 = vmatpush2.bf16.msra.mxu0 %v1323
    %1970 = vmatprep.mubr.bf16.mxu0 %v352
    %1971 = vmatmul.mubr.bf16.gmra.mxu0 %v351
    %v1972 = vpop.f32.mrf.mxu0
    %v1973 = vadd.f32 %v1930, %v1972
    %v1974 = vpop.f32.mrf.mxu0
    %v1975 = vadd.f32 %v1932, %v1974
    %v1976 = vpop.f32.mrf.mxu0
    %v1977 = vadd.f32 %v1934, %v1976
    %v1978 = vpop.f32.mrf.mxu0
    %v1979 = vadd.f32 %v1936, %v1978
    %1980 = vdwg.mxu0
    %v1981 = vmax.f32 %v1715, 0.0
    %v1982 = vmax.f32 %v1717, 0.0
    %v1983 = vmax.f32 %v1801, 0.0
    %v1984 = vmax.f32 %v1803, 0.0
    %v1985 = vmax.f32 %v1887, 0.0
    %v1986 = vmax.f32 %v1889, 0.0
    %v1987 = vmax.f32 %v1973, 0.0
    %v1988 = vmax.f32 %v1975, 0.0
    %v1989 = vmax.f32 %v1719, 0.0
    %v1990 = vmax.f32 %v1721, 0.0
    %v1991 = vmax.f32 %v1805, 0.0
    %v1992 = vmax.f32 %v1807, 0.0
    %v1993 = vmax.f32 %v1891, 0.0
    %v1994 = vmax.f32 %v1893, 0.0
    %v1995 = vmax.f32 %v1977, 0.0
    %v1996 = vmax.f32 %v1979, 0.0
    %v1997 = vpack.c.bf16 %v1989, %v1981
    %v1998 = vpack.c.bf16 %v1990, %v1982
    %v1999 = vpack.c.bf16 %v1991, %v1983
    %v2000 = vpack.c.bf16 %v1992, %v1984
    %v2001 = vpack.c.bf16 %v1993, %v1985
    %v2002 = vpack.c.bf16 %v1994, %v1986
    %v2003 = vpack.c.bf16 %v1995, %v1987
    %v2004 = vpack.c.bf16 %v1996, %v1988
    %v2005 = vld [vmem:[%s3] sm:$0xf]
    %v2006 = vld [vmem:[%s3 + $0x4] sm:$0xf]
    %v2007 = vld [vmem:[%s3 + $0x8] sm:$0xf]
    %v2008 = vld [vmem:[%s3 + $0xc] sm:$0xf]
    %v2009 = vld [vmem:[%s3 + $0x10] sm:$0xf]
    %v2010 = vld [vmem:[%s3 + $0x14] sm:$0xf]
    %v2011 = vld [vmem:[%s3 + $0x18] sm:$0xf]
    %v2012 = vld [vmem:[%s3 + $0x1c] sm:$0xf]
    %v2013 = vld [vmem:[%s3 + $0x20] sm:$0xf]
    %v2014 = vld [vmem:[%s3 + $0x24] sm:$0xf]
    %v2015 = vld [vmem:[%s3 + $0x28] sm:$0xf]
    %v2016 = vld [vmem:[%s3 + $0x2c] sm:$0xf]
    %v2017 = vld [vmem:[%s3 + $0x30] sm:$0xf]
    %v2018 = vld [vmem:[%s3 + $0x34] sm:$0xf]
    %v2019 = vld [vmem:[%s3 + $0x38] sm:$0xf]
    %v2020 = vld [vmem:[%s3 + $0x3c] sm:$0xf]
    %v2021 = vld [vmem:[%s3 + $0x40] sm:$0xf]
    %v2022 = vld [vmem:[%s3 + $0x44] sm:$0xf]
    %v2023 = vld [vmem:[%s3 + $0x48] sm:$0xf]
    %v2024 = vld [vmem:[%s3 + $0x4c] sm:$0xf]
    %v2025 = vld [vmem:[%s3 + $0x50] sm:$0xf]
    %v2026 = vld [vmem:[%s3 + $0x54] sm:$0xf]
    %v2027 = vld [vmem:[%s3 + $0x58] sm:$0xf]
    %v2028 = vld [vmem:[%s3 + $0x5c] sm:$0xf]
    %v2029 = vld [vmem:[%s3 + $0x60] sm:$0xf]
    %v2030 = vld [vmem:[%s3 + $0x64] sm:$0xf]
    %v2031 = vld [vmem:[%s3 + $0x68] sm:$0xf]
    %v2032 = vld [vmem:[%s3 + $0x6c] sm:$0xf]
    %v2033 = vld [vmem:[%s3 + $0x70] sm:$0xf]
    %v2034 = vld [vmem:[%s3 + $0x74] sm:$0xf]
    %v2035 = vld [vmem:[%s3 + $0x78] sm:$0xf]
    %v2036 = vld [vmem:[%s3 + $0x7c] sm:$0xf]
    %v2037 = vld [vmem:[%s3 + $0x80] sm:$0xf]
    %v2038 = vld [vmem:[%s3 + $0x84] sm:$0xf]
    %v2039 = vld [vmem:[%s3 + $0x88] sm:$0xf]
    %v2040 = vld [vmem:[%s3 + $0x8c] sm:$0xf]
    %v2041 = vld [vmem:[%s3 + $0x90] sm:$0xf]
    %v2042 = vld [vmem:[%s3 + $0x94] sm:$0xf]
    %v2043 = vld [vmem:[%s3 + $0x98] sm:$0xf]
    %v2044 = vld [vmem:[%s3 + $0x9c] sm:$0xf]
    %v2045 = vld [vmem:[%s3 + $0xa0] sm:$0xf]
    %v2046 = vld [vmem:[%s3 + $0xa4] sm:$0xf]
    %v2047 = vld [vmem:[%s3 + $0xa8] sm:$0xf]
    %v2048 = vld [vmem:[%s3 + $0xac] sm:$0xf]
    %v2049 = vld [vmem:[%s3 + $0xb0] sm:$0xf]
    %v2050 = vld [vmem:[%s3 + $0xb4] sm:$0xf]
    %v2051 = vld [vmem:[%s3 + $0xb8] sm:$0xf]
    %v2052 = vld [vmem:[%s3 + $0xbc] sm:$0xf]
    %v2053 = vld [vmem:[%s3 + $0xc0] sm:$0xf]
    %v2054 = vld [vmem:[%s3 + $0xc4] sm:$0xf]
    %v2055 = vld [vmem:[%s3 + $0xc8] sm:$0xf]
    %v2056 = vld [vmem:[%s3 + $0xcc] sm:$0xf]
    %v2057 = vld [vmem:[%s3 + $0xd0] sm:$0xf]
    %v2058 = vld [vmem:[%s3 + $0xd4] sm:$0xf]
    %v2059 = vld [vmem:[%s3 + $0xd8] sm:$0xf]
    %v2060 = vld [vmem:[%s3 + $0xdc] sm:$0xf]
    %v2061 = vld [vmem:[%s3 + $0xe0] sm:$0xf]
    %v2062 = vld [vmem:[%s3 + $0xe4] sm:$0xf]
    %v2063 = vld [vmem:[%s3 + $0xe8] sm:$0xf]
    %v2064 = vld [vmem:[%s3 + $0xec] sm:$0xf]
    %v2065 = vld [vmem:[%s3 + $0xf0] sm:$0xf]
    %v2066 = vld [vmem:[%s3 + $0xf4] sm:$0xf]
    %v2067 = vld [vmem:[%s3 + $0xf8] sm:$0xf]
    %v2068 = vld [vmem:[%s3 + $0xfc] sm:$0xf]
    %v2069 = vld [vmem:[%s3 + $0x100] sm:$0xf]
    %v2070 = vld [vmem:[%s3 + $0x104] sm:$0xf]
    %v2071 = vld [vmem:[%s3 + $0x108] sm:$0xf]
    %v2072 = vld [vmem:[%s3 + $0x10c] sm:$0xf]
    %v2073 = vld [vmem:[%s3 + $0x110] sm:$0xf]
    %v2074 = vld [vmem:[%s3 + $0x114] sm:$0xf]
    %v2075 = vld [vmem:[%s3 + $0x118] sm:$0xf]
    %v2076 = vld [vmem:[%s3 + $0x11c] sm:$0xf]
    %v2077 = vld [vmem:[%s3 + $0x120] sm:$0xf]
    %v2078 = vld [vmem:[%s3 + $0x124] sm:$0xf]
    %v2079 = vld [vmem:[%s3 + $0x128] sm:$0xf]
    %v2080 = vld [vmem:[%s3 + $0x12c] sm:$0xf]
    %v2081 = vld [vmem:[%s3 + $0x130] sm:$0xf]
    %v2082 = vld [vmem:[%s3 + $0x134] sm:$0xf]
    %v2083 = vld [vmem:[%s3 + $0x138] sm:$0xf]
    %v2084 = vld [vmem:[%s3 + $0x13c] sm:$0xf]
    %v2085 = vld [vmem:[%s3 + $0x140] sm:$0xf]
    %v2086 = vld [vmem:[%s3 + $0x144] sm:$0xf]
    %v2087 = vld [vmem:[%s3 + $0x148] sm:$0xf]
    %v2088 = vld [vmem:[%s3 + $0x14c] sm:$0xf]
    %v2089 = vld [vmem:[%s3 + $0x150] sm:$0xf]
    %v2090 = vld [vmem:[%s3 + $0x154] sm:$0xf]
    %v2091 = vld [vmem:[%s3 + $0x158] sm:$0xf]
    %v2092 = vld [vmem:[%s3 + $0x15c] sm:$0xf]
    %v2093 = vld [vmem:[%s3 + $0x160] sm:$0xf]
    %v2094 = vld [vmem:[%s3 + $0x164] sm:$0xf]
    %v2095 = vld [vmem:[%s3 + $0x168] sm:$0xf]
    %v2096 = vld [vmem:[%s3 + $0x16c] sm:$0xf]
    %v2097 = vld [vmem:[%s3 + $0x170] sm:$0xf]
    %v2098 = vld [vmem:[%s3 + $0x174] sm:$0xf]
    %v2099 = vld [vmem:[%s3 + $0x178] sm:$0xf]
    %v2100 = vld [vmem:[%s3 + $0x17c] sm:$0xf]
    %v2101 = vld [vmem:[%s3 + $0x180] sm:$0xf]
    %v2102 = vld [vmem:[%s3 + $0x184] sm:$0xf]
    %v2103 = vld [vmem:[%s3 + $0x188] sm:$0xf]
    %v2104 = vld [vmem:[%s3 + $0x18c] sm:$0xf]
    %v2105 = vld [vmem:[%s3 + $0x190] sm:$0xf]
    %v2106 = vld [vmem:[%s3 + $0x194] sm:$0xf]
    %v2107 = vld [vmem:[%s3 + $0x198] sm:$0xf]
    %v2108 = vld [vmem:[%s3 + $0x19c] sm:$0xf]
    %v2109 = vld [vmem:[%s3 + $0x1a0] sm:$0xf]
    %v2110 = vld [vmem:[%s3 + $0x1a4] sm:$0xf]
    %v2111 = vld [vmem:[%s3 + $0x1a8] sm:$0xf]
    %v2112 = vld [vmem:[%s3 + $0x1ac] sm:$0xf]
    %v2113 = vld [vmem:[%s3 + $0x1b0] sm:$0xf]
    %v2114 = vld [vmem:[%s3 + $0x1b4] sm:$0xf]
    %v2115 = vld [vmem:[%s3 + $0x1b8] sm:$0xf]
    %v2116 = vld [vmem:[%s3 + $0x1bc] sm:$0xf]
    %v2117 = vld [vmem:[%s3 + $0x1c0] sm:$0xf]
    %v2118 = vld [vmem:[%s3 + $0x1c4] sm:$0xf]
    %v2119 = vld [vmem:[%s3 + $0x1c8] sm:$0xf]
    %v2120 = vld [vmem:[%s3 + $0x1cc] sm:$0xf]
    %v2121 = vld [vmem:[%s3 + $0x1d0] sm:$0xf]
    %v2122 = vld [vmem:[%s3 + $0x1d4] sm:$0xf]
    %v2123 = vld [vmem:[%s3 + $0x1d8] sm:$0xf]
    %v2124 = vld [vmem:[%s3 + $0x1dc] sm:$0xf]
    %v2125 = vld [vmem:[%s3 + $0x1e0] sm:$0xf]
    %v2126 = vld [vmem:[%s3 + $0x1e4] sm:$0xf]
    %v2127 = vld [vmem:[%s3 + $0x1e8] sm:$0xf]
    %v2128 = vld [vmem:[%s3 + $0x1ec] sm:$0xf]
    %v2129 = vld [vmem:[%s3 + $0x1f0] sm:$0xf]
    %v2130 = vld [vmem:[%s3 + $0x1f4] sm:$0xf]
    %v2131 = vld [vmem:[%s3 + $0x1f8] sm:$0xf]
    %v2132 = vld [vmem:[%s3 + $0x1fc] sm:$0xf]
    %v2133 = vld [vmem:[%s4] sm:$0x1]
    %v2135 = vlaneseq
    %v2136 = vshrl.u32 %v2135, 7
    %v2137 = vsub.s32 0, %v2136
    %v2138 = vrot.slane %v2133, %v2137
    %v2268 = vunpack.c.l.b16 %v2005
    %v2269 = vunpack.c.l.b16 %v2006
    %v2270 = vunpack.c.l.b16 %v2007
    %v2271 = vunpack.c.l.b16 %v2008
    %v2272 = vunpack.c.l.b16 %v2009
    %v2273 = vunpack.c.l.b16 %v2010
    %v2274 = vunpack.c.l.b16 %v2011
    %v2275 = vunpack.c.l.b16 %v2012
    %v2276 = vunpack.c.l.b16 %v2013
    %v2277 = vunpack.c.l.b16 %v2014
    %v2278 = vunpack.c.l.b16 %v2015
    %v2279 = vunpack.c.l.b16 %v2016
    %v2280 = vunpack.c.l.b16 %v2017
    %v2281 = vunpack.c.l.b16 %v2018
    %v2282 = vunpack.c.l.b16 %v2019
    %v2283 = vunpack.c.l.b16 %v2020
    %v2284 = vunpack.c.l.b16 %v2021
    %v2285 = vunpack.c.l.b16 %v2022
    %v2286 = vunpack.c.l.b16 %v2023
    %v2287 = vunpack.c.l.b16 %v2024
    %v2288 = vunpack.c.l.b16 %v2025
    %v2289 = vunpack.c.l.b16 %v2026
    %v2290 = vunpack.c.l.b16 %v2027
    %v2291 = vunpack.c.l.b16 %v2028
    %v2292 = vunpack.c.l.b16 %v2029
    %v2293 = vunpack.c.l.b16 %v2030
    %v2294 = vunpack.c.l.b16 %v2031
    %v2295 = vunpack.c.l.b16 %v2032
    %v2296 = vunpack.c.l.b16 %v2033
    %v2297 = vunpack.c.l.b16 %v2034
    %v2298 = vunpack.c.l.b16 %v2035
    %v2299 = vunpack.c.l.b16 %v2036
    %v2300 = vunpack.c.l.b16 %v2037
    %v2301 = vunpack.c.l.b16 %v2038
    %v2302 = vunpack.c.l.b16 %v2039
    %v2303 = vunpack.c.l.b16 %v2040
    %v2304 = vunpack.c.l.b16 %v2041
    %v2305 = vunpack.c.l.b16 %v2042
    %v2306 = vunpack.c.l.b16 %v2043
    %v2307 = vunpack.c.l.b16 %v2044
    %v2308 = vunpack.c.l.b16 %v2045
    %v2309 = vunpack.c.l.b16 %v2046
    %v2310 = vunpack.c.l.b16 %v2047
    %v2311 = vunpack.c.l.b16 %v2048
    %v2312 = vunpack.c.l.b16 %v2049
    %v2313 = vunpack.c.l.b16 %v2050
    %v2314 = vunpack.c.l.b16 %v2051
    %v2315 = vunpack.c.l.b16 %v2052
    %v2316 = vunpack.c.l.b16 %v2053
    %v2317 = vunpack.c.l.b16 %v2054
    %v2318 = vunpack.c.l.b16 %v2055
    %v2319 = vunpack.c.l.b16 %v2056
    %v2320 = vunpack.c.l.b16 %v2057
    %v2321 = vunpack.c.l.b16 %v2058
    %v2322 = vunpack.c.l.b16 %v2059
    %v2323 = vunpack.c.l.b16 %v2060
    %v2324 = vunpack.c.l.b16 %v2061
    %v2325 = vunpack.c.l.b16 %v2062
    %v2326 = vunpack.c.l.b16 %v2063
    %v2327 = vunpack.c.l.b16 %v2064
    %v2328 = vunpack.c.l.b16 %v2065
    %v2329 = vunpack.c.l.b16 %v2066
    %v2330 = vunpack.c.l.b16 %v2067
    %v2331 = vunpack.c.l.b16 %v2068
    %v2332 = vunpack.c.l.b16 %v2069
    %v2333 = vunpack.c.l.b16 %v2070
    %v2334 = vunpack.c.l.b16 %v2071
    %v2335 = vunpack.c.l.b16 %v2072
    %v2336 = vunpack.c.l.b16 %v2073
    %v2337 = vunpack.c.l.b16 %v2074
    %v2338 = vunpack.c.l.b16 %v2075
    %v2339 = vunpack.c.l.b16 %v2076
    %v2340 = vunpack.c.l.b16 %v2077
    %v2341 = vunpack.c.l.b16 %v2078
    %v2342 = vunpack.c.l.b16 %v2079
    %v2343 = vunpack.c.l.b16 %v2080
    %v2344 = vunpack.c.l.b16 %v2081
    %v2345 = vunpack.c.l.b16 %v2082
    %v2346 = vunpack.c.l.b16 %v2083
    %v2347 = vunpack.c.l.b16 %v2084
    %v2348 = vunpack.c.l.b16 %v2085
    %v2349 = vunpack.c.l.b16 %v2086
    %v2350 = vunpack.c.l.b16 %v2087
    %v2351 = vunpack.c.l.b16 %v2088
    %v2352 = vunpack.c.l.b16 %v2089
    %v2353 = vunpack.c.l.b16 %v2090
    %v2354 = vunpack.c.l.b16 %v2091
    %v2355 = vunpack.c.l.b16 %v2092
    %v2356 = vunpack.c.l.b16 %v2093
    %v2357 = vunpack.c.l.b16 %v2094
    %v2358 = vunpack.c.l.b16 %v2095
    %v2359 = vunpack.c.l.b16 %v2096
    %v2360 = vunpack.c.l.b16 %v2097
    %v2361 = vunpack.c.l.b16 %v2098
    %v2362 = vunpack.c.l.b16 %v2099
    %v2363 = vunpack.c.l.b16 %v2100
    %v2364 = vunpack.c.l.b16 %v2101
    %v2365 = vunpack.c.l.b16 %v2102
    %v2366 = vunpack.c.l.b16 %v2103
    %v2367 = vunpack.c.l.b16 %v2104
    %v2368 = vunpack.c.l.b16 %v2105
    %v2369 = vunpack.c.l.b16 %v2106
    %v2370 = vunpack.c.l.b16 %v2107
    %v2371 = vunpack.c.l.b16 %v2108
    %v2372 = vunpack.c.l.b16 %v2109
    %v2373 = vunpack.c.l.b16 %v2110
    %v2374 = vunpack.c.l.b16 %v2111
    %v2375 = vunpack.c.l.b16 %v2112
    %v2376 = vunpack.c.l.b16 %v2113
    %v2377 = vunpack.c.l.b16 %v2114
    %v2378 = vunpack.c.l.b16 %v2115
    %v2379 = vunpack.c.l.b16 %v2116
    %v2380 = vunpack.c.l.b16 %v2117
    %v2381 = vunpack.c.l.b16 %v2118
    %v2382 = vunpack.c.l.b16 %v2119
    %v2383 = vunpack.c.l.b16 %v2120
    %v2384 = vunpack.c.l.b16 %v2121
    %v2385 = vunpack.c.l.b16 %v2122
    %v2386 = vunpack.c.l.b16 %v2123
    %v2387 = vunpack.c.l.b16 %v2124
    %v2388 = vunpack.c.l.b16 %v2125
    %v2389 = vunpack.c.l.b16 %v2126
    %v2390 = vunpack.c.l.b16 %v2127
    %v2391 = vunpack.c.l.b16 %v2128
    %v2392 = vunpack.c.l.b16 %v2129
    %v2393 = vunpack.c.l.b16 %v2130
    %v2394 = vunpack.c.l.b16 %v2131
    %v2395 = vunpack.c.l.b16 %v2132
    %v2396 = vpack.c.b16 %v2269, %v2268
    %v2397 = vpack.c.b16 %v2271, %v2270
    %v2398 = vpack.c.b16 %v2273, %v2272
    %v2399 = vpack.c.b16 %v2275, %v2274
    %v2400 = vpack.c.b16 %v2277, %v2276
    %v2401 = vpack.c.b16 %v2279, %v2278
    %v2402 = vpack.c.b16 %v2281, %v2280
    %v2403 = vpack.c.b16 %v2283, %v2282
    %v2404 = vpack.c.b16 %v2285, %v2284
    %v2405 = vpack.c.b16 %v2287, %v2286
    %v2406 = vpack.c.b16 %v2289, %v2288
    %v2407 = vpack.c.b16 %v2291, %v2290
    %v2408 = vpack.c.b16 %v2293, %v2292
    %v2409 = vpack.c.b16 %v2295, %v2294
    %v2410 = vpack.c.b16 %v2297, %v2296
    %v2411 = vpack.c.b16 %v2299, %v2298
    %v2412 = vpack.c.b16 %v2301, %v2300
    %v2413 = vpack.c.b16 %v2303, %v2302
    %v2414 = vpack.c.b16 %v2305, %v2304
    %v2415 = vpack.c.b16 %v2307, %v2306
    %v2416 = vpack.c.b16 %v2309, %v2308
    %v2417 = vpack.c.b16 %v2311, %v2310
    %v2418 = vpack.c.b16 %v2313, %v2312
    %v2419 = vpack.c.b16 %v2315, %v2314
    %v2420 = vpack.c.b16 %v2317, %v2316
    %v2421 = vpack.c.b16 %v2319, %v2318
    %v2422 = vpack.c.b16 %v2321, %v2320
    %v2423 = vpack.c.b16 %v2323, %v2322
    %v2424 = vpack.c.b16 %v2325, %v2324
    %v2425 = vpack.c.b16 %v2327, %v2326
    %v2426 = vpack.c.b16 %v2329, %v2328
    %v2427 = vpack.c.b16 %v2331, %v2330
    %v2428 = vpack.c.b16 %v2333, %v2332
    %v2429 = vpack.c.b16 %v2335, %v2334
    %v2430 = vpack.c.b16 %v2337, %v2336
    %v2431 = vpack.c.b16 %v2339, %v2338
    %v2432 = vpack.c.b16 %v2341, %v2340
    %v2433 = vpack.c.b16 %v2343, %v2342
    %v2434 = vpack.c.b16 %v2345, %v2344
    %v2435 = vpack.c.b16 %v2347, %v2346
    %v2436 = vpack.c.b16 %v2349, %v2348
    %v2437 = vpack.c.b16 %v2351, %v2350
    %v2438 = vpack.c.b16 %v2353, %v2352
    %v2439 = vpack.c.b16 %v2355, %v2354
    %v2440 = vpack.c.b16 %v2357, %v2356
    %v2441 = vpack.c.b16 %v2359, %v2358
    %v2442 = vpack.c.b16 %v2361, %v2360
    %v2443 = vpack.c.b16 %v2363, %v2362
    %v2444 = vpack.c.b16 %v2365, %v2364
    %v2445 = vpack.c.b16 %v2367, %v2366
    %v2446 = vpack.c.b16 %v2369, %v2368
    %v2447 = vpack.c.b16 %v2371, %v2370
    %v2448 = vpack.c.b16 %v2373, %v2372
    %v2449 = vpack.c.b16 %v2375, %v2374
    %v2450 = vpack.c.b16 %v2377, %v2376
    %v2451 = vpack.c.b16 %v2379, %v2378
    %v2452 = vpack.c.b16 %v2381, %v2380
    %v2453 = vpack.c.b16 %v2383, %v2382
    %v2454 = vpack.c.b16 %v2385, %v2384
    %v2455 = vpack.c.b16 %v2387, %v2386
    %v2456 = vpack.c.b16 %v2389, %v2388
    %v2457 = vpack.c.b16 %v2391, %v2390
    %v2458 = vpack.c.b16 %v2393, %v2392
    %v2459 = vpack.c.b16 %v2395, %v2394
    %2524 = vmatprep.subr.bf16.mxu0 0
    %2525 = vmatpush1.bf16.msra.mxu0 %v2403
    %2526 = vmatprep.subr.bf16.mxu0 0
    %2527 = vmatpush1.bf16.msra.mxu0 %v2402
    %2528 = vmatprep.subr.bf16.mxu0 0
    %2529 = vmatpush1.bf16.msra.mxu0 %v2401
    %2530 = vmatprep.subr.bf16.mxu0 0
    %2531 = vmatpush1.bf16.msra.mxu0 %v2400
    %2532 = vmatprep.subr.bf16.mxu0 0
    %2533 = vmatpush1.bf16.msra.mxu0 %v2399
    %2534 = vmatprep.subr.bf16.mxu0 0
    %2535 = vmatpush1.bf16.msra.mxu0 %v2398
    %2536 = vmatprep.subr.bf16.mxu0 0
    %2537 = vmatpush1.bf16.msra.mxu0 %v2397
    %2538 = vmatprep.subr.bf16.mxu0 0
    %2539 = vmatpush1.bf16.msra.mxu0 %v2396
    %2540 = vmatprep.subr.bf16.mxu0 0
    %2541 = vmatpush2.bf16.msra.mxu0 %v2411
    %2542 = vmatprep.subr.bf16.mxu0 0
    %2543 = vmatpush2.bf16.msra.mxu0 %v2410
    %2544 = vmatprep.subr.bf16.mxu0 0
    %2545 = vmatpush2.bf16.msra.mxu0 %v2409
    %2546 = vmatprep.subr.bf16.mxu0 0
    %2547 = vmatpush2.bf16.msra.mxu0 %v2408
    %2548 = vmatprep.subr.bf16.mxu0 0
    %2549 = vmatpush2.bf16.msra.mxu0 %v2407
    %2550 = vmatprep.subr.bf16.mxu0 0
    %2551 = vmatpush2.bf16.msra.mxu0 %v2406
    %2552 = vmatprep.subr.bf16.mxu0 0
    %2553 = vmatpush2.bf16.msra.mxu0 %v2405
    %2554 = vmatprep.subr.bf16.mxu0 0
    %2555 = vmatpush2.bf16.msra.mxu0 %v2404
    %2556 = vmatprep.mubr.bf16.mxu0 %v1998
    %2557 = vmatmul.mubr.bf16.gmra.mxu0 %v1997
    %v2558 = vpop.f32.mrf.mxu0
    %v2559 = vadd.f32 %v2138, %v2558
    %v2560 = vpop.f32.mrf.mxu0
    %v2561 = vpop.f32.mrf.mxu0
    %v2562 = vadd.f32 %v2138, %v2561
    %v2563 = vpop.f32.mrf.mxu0
    %2564 = vdwg.mxu0
    %2565 = vmatprep.subr.bf16.mxu0 0
    %2566 = vmatpush1.bf16.msra.mxu0 %v2419
    %2567 = vmatprep.subr.bf16.mxu0 0
    %2568 = vmatpush1.bf16.msra.mxu0 %v2418
    %2569 = vmatprep.subr.bf16.mxu0 0
    %2570 = vmatpush1.bf16.msra.mxu0 %v2417
    %2571 = vmatprep.subr.bf16.mxu0 0
    %2572 = vmatpush1.bf16.msra.mxu0 %v2416
    %2573 = vmatprep.subr.bf16.mxu0 0
    %2574 = vmatpush1.bf16.msra.mxu0 %v2415
    %2575 = vmatprep.subr.bf16.mxu0 0
    %2576 = vmatpush1.bf16.msra.mxu0 %v2414
    %2577 = vmatprep.subr.bf16.mxu0 0
    %2578 = vmatpush1.bf16.msra.mxu0 %v2413
    %2579 = vmatprep.subr.bf16.mxu0 0
    %2580 = vmatpush1.bf16.msra.mxu0 %v2412
    %2581 = vmatprep.subr.bf16.mxu0 0
    %2582 = vmatpush2.bf16.msra.mxu0 %v2427
    %2583 = vmatprep.subr.bf16.mxu0 0
    %2584 = vmatpush2.bf16.msra.mxu0 %v2426
    %2585 = vmatprep.subr.bf16.mxu0 0
    %2586 = vmatpush2.bf16.msra.mxu0 %v2425
    %2587 = vmatprep.subr.bf16.mxu0 0
    %2588 = vmatpush2.bf16.msra.mxu0 %v2424
    %2589 = vmatprep.subr.bf16.mxu0 0
    %2590 = vmatpush2.bf16.msra.mxu0 %v2423
    %2591 = vmatprep.subr.bf16.mxu0 0
    %2592 = vmatpush2.bf16.msra.mxu0 %v2422
    %2593 = vmatprep.subr.bf16.mxu0 0
    %2594 = vmatpush2.bf16.msra.mxu0 %v2421
    %2595 = vmatprep.subr.bf16.mxu0 0
    %2596 = vmatpush2.bf16.msra.mxu0 %v2420
    %2597 = vmatprep.mubr.bf16.mxu0 %v2000
    %2598 = vmatmul.mubr.bf16.gmra.mxu0 %v1999
    %v2599 = vpop.f32.mrf.mxu0
    %v2600 = vadd.f32 %v2559, %v2599
    %v2601 = vpop.f32.mrf.mxu0
    %v2602 = vpop.f32.mrf.mxu0
    %v2603 = vadd.f32 %v2562, %v2602
    %v2604 = vpop.f32.mrf.mxu0
    %2605 = vdwg.mxu0
    %2606 = vmatprep.subr.bf16.mxu0 0
    %2607 = vmatpush1.bf16.msra.mxu0 %v2435
    %2608 = vmatprep.subr.bf16.mxu0 0
    %2609 = vmatpush1.bf16.msra.mxu0 %v2434
    %2610 = vmatprep.subr.bf16.mxu0 0
    %2611 = vmatpush1.bf16.msra.mxu0 %v2433
    %2612 = vmatprep.subr.bf16.mxu0 0
    %2613 = vmatpush1.bf16.msra.mxu0 %v2432
    %2614 = vmatprep.subr.bf16.mxu0 0
    %2615 = vmatpush1.bf16.msra.mxu0 %v2431
    %2616 = vmatprep.subr.bf16.mxu0 0
    %2617 = vmatpush1.bf16.msra.mxu0 %v2430
    %2618 = vmatprep.subr.bf16.mxu0 0
    %2619 = vmatpush1.bf16.msra.mxu0 %v2429
    %2620 = vmatprep.subr.bf16.mxu0 0
    %2621 = vmatpush1.bf16.msra.mxu0 %v2428
    %2622 = vmatprep.subr.bf16.mxu0 0
    %2623 = vmatpush2.bf16.msra.mxu0 %v2443
    %2624 = vmatprep.subr.bf16.mxu0 0
    %2625 = vmatpush2.bf16.msra.mxu0 %v2442
    %2626 = vmatprep.subr.bf16.mxu0 0
    %2627 = vmatpush2.bf16.msra.mxu0 %v2441
    %2628 = vmatprep.subr.bf16.mxu0 0
    %2629 = vmatpush2.bf16.msra.mxu0 %v2440
    %2630 = vmatprep.subr.bf16.mxu0 0
    %2631 = vmatpush2.bf16.msra.mxu0 %v2439
    %2632 = vmatprep.subr.bf16.mxu0 0
    %2633 = vmatpush2.bf16.msra.mxu0 %v2438
    %2634 = vmatprep.subr.bf16.mxu0 0
    %2635 = vmatpush2.bf16.msra.mxu0 %v2437
    %2636 = vmatprep.subr.bf16.mxu0 0
    %2637 = vmatpush2.bf16.msra.mxu0 %v2436
    %2638 = vmatprep.mubr.bf16.mxu0 %v2002
    %2639 = vmatmul.mubr.bf16.gmra.mxu0 %v2001
    %v2640 = vpop.f32.mrf.mxu0
    %v2641 = vadd.f32 %v2600, %v2640
    %v2642 = vpop.f32.mrf.mxu0
    %v2643 = vpop.f32.mrf.mxu0
    %v2644 = vadd.f32 %v2603, %v2643
    %v2645 = vpop.f32.mrf.mxu0
    %2646 = vdwg.mxu0
    %2647 = vmatprep.subr.bf16.mxu0 0
    %2648 = vmatpush1.bf16.msra.mxu0 %v2451
    %2649 = vmatprep.subr.bf16.mxu0 0
    %2650 = vmatpush1.bf16.msra.mxu0 %v2450
    %2651 = vmatprep.subr.bf16.mxu0 0
    %2652 = vmatpush1.bf16.msra.mxu0 %v2449
    %2653 = vmatprep.subr.bf16.mxu0 0
    %2654 = vmatpush1.bf16.msra.mxu0 %v2448
    %2655 = vmatprep.subr.bf16.mxu0 0
    %2656 = vmatpush1.bf16.msra.mxu0 %v2447
    %2657 = vmatprep.subr.bf16.mxu0 0
    %2658 = vmatpush1.bf16.msra.mxu0 %v2446
    %2659 = vmatprep.subr.bf16.mxu0 0
    %2660 = vmatpush1.bf16.msra.mxu0 %v2445
    %2661 = vmatprep.subr.bf16.mxu0 0
    %2662 = vmatpush1.bf16.msra.mxu0 %v2444
    %2663 = vmatprep.subr.bf16.mxu0 0
    %2664 = vmatpush2.bf16.msra.mxu0 %v2459
    %2665 = vmatprep.subr.bf16.mxu0 0
    %2666 = vmatpush2.bf16.msra.mxu0 %v2458
    %2667 = vmatprep.subr.bf16.mxu0 0
    %2668 = vmatpush2.bf16.msra.mxu0 %v2457
    %2669 = vmatprep.subr.bf16.mxu0 0
    %2670 = vmatpush2.bf16.msra.mxu0 %v2456
    %2671 = vmatprep.subr.bf16.mxu0 0
    %2672 = vmatpush2.bf16.msra.mxu0 %v2455
    %2673 = vmatprep.subr.bf16.mxu0 0
    %2674 = vmatpush2.bf16.msra.mxu0 %v2454
    %2675 = vmatprep.subr.bf16.mxu0 0
    %2676 = vmatpush2.bf16.msra.mxu0 %v2453
    %2677 = vmatprep.subr.bf16.mxu0 0
    %2678 = vmatpush2.bf16.msra.mxu0 %v2452
    %2679 = vmatprep.mubr.bf16.mxu0 %v2004
    %2680 = vmatmul.mubr.bf16.gmra.mxu0 %v2003
    %v2681 = vpop.f32.mrf.mxu0
    %v2682 = vadd.f32 %v2641, %v2681
    %v2683 = vpop.f32.mrf.mxu0
    %v2684 = vpop.f32.mrf.mxu0
    %v2685 = vadd.f32 %v2644, %v2684
    %v2686 = vpop.f32.mrf.mxu0
    %2687 = vdwg.mxu0
    %2688 = vst [vmem:[%s5] sm:$0xff] %v2682
    %2689 = vst [vmem:[%s5 + $0x8] sm:$0xff] %v2685
    // Predicated region
    $region26: #{_forward_impl.1} parent=1 // pred_check
      _
    $region27: #{_forward_impl.1} parent=1 // pred_check_branch
      %2691 = sbr.rel (0) target = $region29
    $region28: #{_forward_impl.1} parent=1 // pred_region
      _
    $region29: #{_forward_impl.1} parent=1 // pred_fallthru
      _
    // Predicated region
    $region30: #{_forward_impl.1} parent=1 // pred_check
      _
    $region31: #{_forward_impl.1} parent=1 // pred_check_branch
      %2693 = sbr.rel (0) target = $region33
    $region32: #{_forward_impl.1} parent=1 // pred_region
      _
    $region33: #{_forward_impl.1} parent=1 // pred_fallthru
      _
    %2694 = vsyncpa [#allocation3], 1

</llo_original>
